<compile_context>
chip_gen: v7x
topology: tpu7x:2x2x1
jax: 0.10.0
libtpu: 0.0.40
codegen_flags: <defaults>
</compile_context>

<pallas_src>
import functools

import jax
import jax.numpy as jnp
import numpy as np
from jax.experimental import pallas as pl
from jax.experimental.pallas import tpu as pltpu


# ----------------------------------------------------------------------------
# Pallas kernel: one molecule-chunk per grid step (message passing + readout).
# ----------------------------------------------------------------------------
def mpn_kernel(
    b2a_ref,        # (C, NB) int32   SMEM (scalar prefetch)
    f_atoms_ref,    # (1, NA, AF) bf16
    f_bonds_ref,    # (1, NB, BF) bf16
    a_ref,          # (1, NA, NB) bf16  incidence counts (neighbor-sum matrix)
    s_ref,          # (1, NM, NA) bf16  0/1 per-molecule sum matrix
    invc_ref,       # (1, NM, 1)  f32   1/a_size per molecule (0 for padding)
    w_i_ref,        # (BF, H) bf16
    w_h_ref,        # (H, H)  bf16
    w_o_a_ref,      # (AF, H) bf16  top block of W_o (acts on f_atoms)
    w_o_m_ref,      # (H, H)  bf16  bottom block of W_o (acts on a_message)
    b_o_ref,        # (1, H)  f32   W_o bias
    out_ref,        # (1, NM, H) f32
    a_msg_ref,      # (NA, H) f32 scratch: gather source (a_message)
    gath_ref,       # (NB, H) f32 scratch: gathered a_message[b2a]
    *,
    depth: int,
):
    c = pl.program_id(0)

    f_atoms = f_atoms_ref[0]
    f_bonds = f_bonds_ref[0]
    A = a_ref[0]
    w_i = w_i_ref[...]
    w_h = w_h_ref[...]

    nb = f_bonds.shape[0]

    # input = W_i(f_bonds); message = act(input)      (f32 accumulation)
    inp = jnp.dot(f_bonds, w_i, preferred_element_type=jnp.float32)
    message = jnp.maximum(inp, 0.0)

    # Hoisted parity mask for the reverse-bond pair swap (b2revb: 2k <-> 2k+1):
    # one (NB, 1) boolean, broadcast inside the select.
    par_even = (jax.lax.broadcasted_iota(jnp.int32, (nb, 1), 0) % 2) == 0

    # depth - 1 message-passing steps (small static unrolled loop)
    for _ in range(depth - 1):
        m_bf = message.astype(jnp.bfloat16)
        # nei_a_message = index_select_ND(message, a2b); a_message = sum(dim=1)
        # TODO(synk): replace the dense A matmul with an a2b segment-sum /
        # streamed tiles at production bond counts.
        a_msg_ref[...] = jnp.dot(A, m_bf, preferred_element_type=jnp.float32)
        # a_message[b2a]  -- real row gather via SMEM indices (B2A matmul gone)
        for i in range(nb):
            idx = b2a_ref[c, i]
            gath_ref[pl.ds(i, 1), :] = a_msg_ref[pl.ds(idx, 1), :]
        # rev_message = message[b2revb] == even/odd pair swap of rows (XLU)
        nxt = pltpu.roll(message, shift=nb - 1, axis=0)   # message[i+1 mod nb]
        prv = pltpu.roll(message, shift=1, axis=0)        # message[i-1 mod nb]
        rev = jnp.where(par_even, nxt, prv)
        pre = gath_ref[...] - rev
        # message = act(input + W_h(message))   (dropout is identity in eval)
        msg = jnp.dot(pre.astype(jnp.bfloat16), w_h,
                      preferred_element_type=jnp.float32)
        message = jnp.maximum(inp + msg, 0.0)
        # TODO(synk): on v5e keep `message` bf16-resident to halve f32 store
        # traffic (single vst slot); kept f32 here for the sublane roll.

    # readout: a_message = sum of incoming bond messages per atom
    a_message = jnp.dot(A, message.astype(jnp.bfloat16),
                        preferred_element_type=jnp.float32)
    # atom_hiddens = act(W_o(cat([f_atoms, a_message])))
    # (concat folded into split weight blocks; no in-kernel concatenate)
    atom_hiddens = (
        jnp.dot(f_atoms, w_o_a_ref[...], preferred_element_type=jnp.float32)
        + jnp.dot(a_message.astype(jnp.bfloat16), w_o_m_ref[...],
                  preferred_element_type=jnp.float32)
        + b_o_ref[...]
    )
    atom_hiddens = jnp.maximum(atom_hiddens, 0.0)

    # per-molecule mean: exact 0/1 sum matrix, f32 1/a_size applied post-dot
    mol_sum = jnp.dot(s_ref[0], atom_hiddens.astype(jnp.bfloat16),
                      preferred_element_type=jnp.float32)
    out_ref[0] = mol_sum * invc_ref[0]


def mpn_forward(b2a_idx, f_atoms, f_bonds, A, S, inv_cnt,
                w_i, w_h, w_o_a, w_o_m, b_o, *, depth):
    C, NA, AF = f_atoms.shape
    _, NB, BF = f_bonds.shape
    _, NM, _ = S.shape
    H = w_i.shape[1]

    flops = 2 * C * (
        NB * BF * H
        + (depth - 1) * (NA * NB * H + NB * H * H)
        + NA * NB * H + NA * AF * H + NA * H * H
        + NM * NA * H
    )
    inputs = (b2a_idx, f_atoms, f_bonds, A, S, inv_cnt,
              w_i, w_h, w_o_a, w_o_m, b_o)
    bytes_accessed = int(sum(x.size * x.dtype.itemsize for x in inputs)
                         + C * NM * H * 4)

    kernel = functools.partial(mpn_kernel, depth=depth)
    grid_spec = pltpu.PrefetchScalarGridSpec(
        num_scalar_prefetch=1,          # b2a -> SMEM
        grid=(C,),                      # independent molecule chunks
        in_specs=[
            # per-chunk streamed tiles (default double-buffered pipeline)
            pl.BlockSpec((1, NA, AF), lambda c, b2a: (c, 0, 0)),  # f_atoms
            pl.BlockSpec((1, NB, BF), lambda c, b2a: (c, 0, 0)),  # f_bonds
            pl.BlockSpec((1, NA, NB), lambda c, b2a: (c, 0, 0)),  # A
            pl.BlockSpec((1, NM, NA), lambda c, b2a: (c, 0, 0)),  # S (0/1 sums)
            pl.BlockSpec((1, NM, 1),  lambda c, b2a: (c, 0, 0)),  # 1/a_size
            # weights: constant index_map -> resident across the grid
            pl.BlockSpec((BF, H), lambda c, b2a: (0, 0)),         # W_i
            pl.BlockSpec((H, H),  lambda c, b2a: (0, 0)),         # W_h
            pl.BlockSpec((AF, H), lambda c, b2a: (0, 0)),         # W_o (atoms)
            pl.BlockSpec((H, H),  lambda c, b2a: (0, 0)),         # W_o (msg)
            pl.BlockSpec((1, H),  lambda c, b2a: (0, 0)),         # W_o bias
        ],
        out_specs=pl.BlockSpec((1, NM, H), lambda c, b2a: (c, 0, 0)),
        scratch_shapes=[
            pltpu.VMEM((NA, H), jnp.float32),   # a_message (gather source)
            pltpu.VMEM((NB, H), jnp.float32),   # gathered a_message[b2a]
        ],
    )
    return pl.pallas_call(
        kernel,
        out_shape=jax.ShapeDtypeStruct((C, NM, H), jnp.float32),
        grid_spec=grid_spec,
        compiler_params=pltpu.CompilerParams(
            # chunk axis is embarrassingly parallel -> both TCs on v7x
            dimension_semantics=("parallel",),
            # never assume 128 MiB: v7x has 64 MiB/TC; this kernel needs far less
            vmem_limit_bytes=32 * 1024 * 1024),
        cost_estimate=pl.CostEstimate(
            flops=int(flops), transcendentals=0,
            bytes_accessed=bytes_accessed),
    )(*inputs)


# ----------------------------------------------------------------------------
# Pure-JAX f32 reference (mirrors the PyTorch forward with gathers).
# ----------------------------------------------------------------------------
def mpn_reference(f_atoms, f_bonds, a2b, b2a, b2revb, a_scope,
                  w_i, w_h, w_o_a, w_o_m, b_o, *, depth):
    inp = f_bonds @ w_i
    message = jnp.maximum(inp, 0.0)
    for _ in range(depth - 1):
        nei_a_message = message[a2b]            # (n_atoms, max_nb, H)
        a_message = nei_a_message.sum(axis=1)
        rev_message = message[b2revb]
        message = a_message[b2a] - rev_message
        message = message @ w_h
        message = jnp.maximum(inp + message, 0.0)
    nei_a_message = message[a2b]
    a_message = nei_a_message.sum(axis=1)
    atom_hiddens = jnp.maximum(f_atoms @ w_o_a + a_message @ w_o_m + b_o, 0.0)
    mol_vecs = []
    for (a_start, a_size) in a_scope:
        if a_size == 0:
            mol_vecs.append(jnp.zeros((w_i.shape[1],), jnp.float32))
        else:
            mol_vecs.append(
                atom_hiddens[a_start:a_start + a_size].sum(axis=0) / a_size)
    return jnp.stack(mol_vecs, axis=0)


# ----------------------------------------------------------------------------
# Glue: synthetic BatchMolGraph-style arrays with paired directed bonds.
# ----------------------------------------------------------------------------
def build_mol_graph(edges, n_heavy_atoms):
    """Single-molecule graph; atom 0 and bonds 0,1 are zero-padding entries."""
    n_atoms = n_heavy_atoms + 1
    a2b_list = [[] for _ in range(n_atoms)]
    b2a = [0, 0]            # two padding bonds, attached to padding atom 0
    b2revb = [1, 0]
    b = 2
    for (a1, a2) in edges:
        b2a.append(a1); a2b_list[a2].append(b)       # bond b:   a1 -> a2
        b2a.append(a2); a2b_list[a1].append(b + 1)   # bond b+1: a2 -> a1
        b2revb.extend([b + 1, b])
        b += 2
    n_bonds = b
    max_nb = max(len(lst) for lst in a2b_list)
    a2b = np.zeros((n_atoms, max_nb), dtype=np.int32)   # padding slots -> bond 0
    for a, lst in enumerate(a2b_list):
        a2b[a, :len(lst)] = lst
    return (a2b, np.array(b2a, np.int32), np.array(b2revb, np.int32),
            n_atoms, n_bonds)


def round_up(x, m):
    return (x + m - 1) // m * m


if __name__ == "__main__":
    ATOM_FDIM = 16
    BOND_FDIM = 24
    HIDDEN = 32
    DEPTH = 3
    LANE = 128

    # Two molecules, one per grid chunk: a 5-ring and a 4-ring.
    mol_edges = [
        [(1, 2), (2, 3), (3, 4), (4, 5), (5, 1)],   # 5-ring, atoms 1..5
        [(1, 2), (2, 3), (3, 4), (4, 1)],           # 4-ring, atoms 1..4
    ]
    graphs = [build_mol_graph(e, max(max(a, b) for a, b in e)) for e in mol_edges]

    key = jax.random.PRNGKey(0)
    kw = jax.random.split(key, 5)
    # Deterministic synthetic parameters (stored as [in, out]).
    w_i = 0.1 * jax.random.normal(kw[0], (BOND_FDIM, HIDDEN), jnp.float32)   # W_i (bias=False)
    w_h = 0.1 * jax.random.normal(kw[1], (HIDDEN, HIDDEN), jnp.float32)      # W_h (bias=False)
    w_o_a = 0.1 * jax.random.normal(kw[2], (ATOM_FDIM, HIDDEN), jnp.float32) # W_o[:, :atom_fdim]^T
    w_o_m = 0.1 * jax.random.normal(kw[3], (HIDDEN, HIDDEN), jnp.float32)    # W_o[:, atom_fdim:]^T
    b_o = 0.1 * jax.random.normal(kw[4], (1, HIDDEN), jnp.float32)           # W_o bias

    # Per-chunk features (row 0 / rows 0-1 are the zero padding rows).
    feats = []
    kf = jax.random.split(jax.random.PRNGKey(1), 2 * len(graphs))
    for m, (a2b, b2a, b2revb, n_atoms, n_bonds) in enumerate(graphs):
        fa = jax.random.normal(kf[2 * m], (n_atoms, ATOM_FDIM), jnp.float32)
        fa = fa.at[0].set(0.0)
        fb = jax.random.normal(kf[2 * m + 1], (n_bonds, BOND_FDIM), jnp.float32)
        fb = fb.at[0].set(0.0).at[1].set(0.0)
        feats.append((fa, fb))

    # f32 chemprop-faithful reference (molecules are independent in the batch).
    refs = []
    for (a2b, b2a, b2revb, n_atoms, n_bonds), (fa, fb) in zip(graphs, feats):
        r = mpn_reference(fa, fb, jnp.asarray(a2b), jnp.asarray(b2a),
                          jnp.asarray(b2revb), [(1, n_atoms - 1)],
                          w_i, w_h, w_o_a, w_o_m, b_o, depth=DEPTH)
        refs.append(r[0])
    ref = jax.block_until_ready(jnp.stack(refs))

    # ---- padded, chunked kernel operands (lane=128, sublane-multiple rows) --
    C = len(graphs)
    NA = round_up(max(g[3] for g in graphs), 16)
    NB = round_up(max(g[4] for g in graphs), 16)
    NM = 8                       # 1 molecule per chunk, padded to a sublane tile
    AF = BF = H = LANE
    assert NB % 2 == 0           # reverse-pair swap needs an even bond count

    bf16 = jnp.bfloat16
    f_atoms_p = np.zeros((C, NA, AF), np.float32)
    f_bonds_p = np.zeros((C, NB, BF), np.float32)
    A_p = np.zeros((C, NA, NB), np.float32)
    S_p = np.zeros((C, NM, NA), np.float32)
    invc_p = np.zeros((C, NM, 1), np.float32)
    b2a_p = np.zeros((C, NB), np.int32)

    for m, ((a2b, b2a, b2revb, n_atoms, n_bonds), (fa, fb)) in enumerate(
            zip(graphs, feats)):
        # Data-layout contract of the roll-based rev swap: directed bonds are
        # stored in adjacent (2k, 2k+1) reverse pairs.
        assert n_bonds % 2 == 0
        assert np.array_equal(b2revb, np.arange(n_bonds) ^ 1)
        f_atoms_p[m, :n_atoms, :ATOM_FDIM] = np.asarray(fa)
        f_bonds_p[m, :n_bonds, :BOND_FDIM] = np.asarray(fb)
        # a2b -> incidence counts (padding a2b slots land on bond column 0;
        # exact because message rows 0/1 stay identically zero).
        A = jax.nn.one_hot(jnp.asarray(a2b), n_bonds, dtype=jnp.float32).sum(axis=1)
        A_p[m, :n_atoms, :n_bonds] = np.asarray(A)
        b2a_p[m, :n_bonds] = b2a
        # Exact mean aggregation: 0/1 sum matrix + f32 1/a_size column.
        S_p[m, 0, 1:n_atoms] = 1.0
        invc_p[m, 0, 0] = 1.0 / (n_atoms - 1)

    def pad2(x, r, c):
        x = np.asarray(x, np.float32)
        return np.pad(x, ((0, r - x.shape[0]), (0, c - x.shape[1])))

    out_p = mpn_forward(
        jnp.asarray(b2a_p),
        jnp.asarray(f_atoms_p, bf16), jnp.asarray(f_bonds_p, bf16),
        jnp.asarray(A_p, bf16), jnp.asarray(S_p, bf16), jnp.asarray(invc_p),
        jnp.asarray(pad2(w_i, BF, H), bf16), jnp.asarray(pad2(w_h, H, H), bf16),
        jnp.asarray(pad2(w_o_a, AF, H), bf16), jnp.asarray(pad2(w_o_m, H, H), bf16),
        jnp.asarray(pad2(b_o, 1, H)),
        depth=DEPTH)
    out_p = jax.block_until_ready(out_p)
    out = np.asarray(out_p)[:, 0, :HIDDEN]     # molecule 0 of each chunk

    assert out.shape == (C, HIDDEN)
    # bf16 MXU operands w/ f32 accumulation vs. pure-f32 reference.
    np.testing.assert_allclose(out, np.asarray(ref), rtol=2e-2, atol=2e-2)

    print("KERNEL_OK")
</pallas_src>

<mosaic_0001>
module attributes {stable_mosaic.version = 11 : i64} {
  func.func @mpn_kernel(%arg0: i32, %arg1: memref<2x16xi32, #tpu.memory_space<smem>>, %arg2: memref<1x16x128xbf16, #tpu.memory_space<vmem>>, %arg3: memref<1x16x128xbf16, #tpu.memory_space<vmem>>, %arg4: memref<1x16x16xbf16, #tpu.memory_space<vmem>>, %arg5: memref<1x8x16xbf16, #tpu.memory_space<vmem>>, %arg6: memref<1x8x1xf32, #tpu.memory_space<vmem>>, %arg7: memref<128x128xbf16, #tpu.memory_space<vmem>>, %arg8: memref<128x128xbf16, #tpu.memory_space<vmem>>, %arg9: memref<128x128xbf16, #tpu.memory_space<vmem>>, %arg10: memref<128x128xbf16, #tpu.memory_space<vmem>>, %arg11: memref<1x128xf32, #tpu.memory_space<vmem>>, %arg12: memref<1x8x128xf32, #tpu.memory_space<vmem>>, %arg13: memref<16x128xf32, #tpu.memory_space<vmem>>, %arg14: memref<16x128xf32, #tpu.memory_space<vmem>>) attributes {dimension_semantics = [#tpu.dimension_semantics<parallel>], iteration_bounds = array<i64: 2>, scalar_prefetch = 1 : i64, scratch_operands = 2 : i64, tpu.core_type = #tpu.core_type<tc>, window_params = [{transform_indices = @transform_0, window_bounds = array<i64: 1, 16, 128>}, {transform_indices = @transform_1, window_bounds = array<i64: 1, 16, 128>}, {transform_indices = @transform_2, window_bounds = array<i64: 1, 16, 16>}, {transform_indices = @transform_3, window_bounds = array<i64: 1, 8, 16>}, {transform_indices = @transform_4, window_bounds = array<i64: 1, 8, 1>}, {pipeline_mode = #tpu.pipeline_mode<synchronous>, transform_indices = @transform_5, window_bounds = array<i64: 128, 128>}, {pipeline_mode = #tpu.pipeline_mode<synchronous>, transform_indices = @transform_6, window_bounds = array<i64: 128, 128>}, {pipeline_mode = #tpu.pipeline_mode<synchronous>, transform_indices = @transform_7, window_bounds = array<i64: 128, 128>}, {pipeline_mode = #tpu.pipeline_mode<synchronous>, transform_indices = @transform_8, window_bounds = array<i64: 128, 128>}, {pipeline_mode = #tpu.pipeline_mode<synchronous>, transform_indices = @transform_9, window_bounds = array<i64: 1, 128>}, {transform_indices = @transform_10, window_bounds = array<i64: 1, 8, 128>}]} {
    %c0 = arith.constant 0 : index
    %c0_0 = arith.constant 0 : index
    %c0_1 = arith.constant 0 : index
    %0 = vector.load %arg2[%c0, %c0_0, %c0_1] : memref<1x16x128xbf16, #tpu.memory_space<vmem>>, vector<1x16x128xbf16>
    %1 = vector.shape_cast %0 : vector<1x16x128xbf16> to vector<16x128xbf16>
    %c0_2 = arith.constant 0 : index
    %c0_3 = arith.constant 0 : index
    %c0_4 = arith.constant 0 : index
    %2 = vector.load %arg3[%c0_2, %c0_3, %c0_4] : memref<1x16x128xbf16, #tpu.memory_space<vmem>>, vector<1x16x128xbf16>
    %3 = vector.shape_cast %2 : vector<1x16x128xbf16> to vector<16x128xbf16>
    %c0_5 = arith.constant 0 : index
    %c0_6 = arith.constant 0 : index
    %c0_7 = arith.constant 0 : index
    %4 = vector.load %arg4[%c0_5, %c0_6, %c0_7] : memref<1x16x16xbf16, #tpu.memory_space<vmem>>, vector<1x16x16xbf16>
    %5 = vector.shape_cast %4 : vector<1x16x16xbf16> to vector<16x16xbf16>
    %c0_8 = arith.constant 0 : index
    %c0_9 = arith.constant 0 : index
    %6 = vector.load %arg7[%c0_8, %c0_9] : memref<128x128xbf16, #tpu.memory_space<vmem>>, vector<128x128xbf16>
    %c0_10 = arith.constant 0 : index
    %c0_11 = arith.constant 0 : index
    %7 = vector.load %arg8[%c0_10, %c0_11] : memref<128x128xbf16, #tpu.memory_space<vmem>>, vector<128x128xbf16>
    %cst = arith.constant dense<0.000000e+00> : vector<16x128xf32>
    %8 = tpu.matmul %3, %6, %cst {dimension_numbers = #tpu.dot_dimension_numbers<[1], [0], [0], [1], [0, 0, 1, 1], [], []>} : vector<16x128xbf16>, vector<128x128xbf16>, vector<16x128xf32> -> vector<16x128xf32>
    %cst_12 = arith.constant 0.000000e+00 : f32
    %9 = vector.broadcast %cst_12 : f32 to vector<16x128xf32>
    %10 = arith.maximumf %8, %9 : vector<16x128xf32>
    %11 = tpu.iota {dimensions = array<i32: 0>} : vector<16x1xi32>
    %c2_i32 = arith.constant 2 : i32
    %c0_i32 = arith.constant 0 : i32
    %12 = arith.cmpi eq, %c2_i32, %c0_i32 : i32
    %c1_i32 = arith.constant 1 : i32
    %13 = arith.select %12, %c1_i32, %c2_i32 : i32
    %14 = vector.broadcast %13 : i32 to vector<16x1xi32>
    %15 = arith.remsi %11, %14 : vector<16x1xi32>
    %c0_i32_13 = arith.constant 0 : i32
    %16 = vector.broadcast %c0_i32_13 : i32 to vector<16x1xi32>
    %17 = arith.cmpi ne, %15, %16 : vector<16x1xi32>
    %c0_i32_14 = arith.constant 0 : i32
    %18 = vector.broadcast %c0_i32_14 : i32 to vector<16x1xi32>
    %19 = arith.cmpi slt, %15, %18 : vector<16x1xi32>
    %c0_i32_15 = arith.constant 0 : i32
    %20 = arith.cmpi slt, %13, %c0_i32_15 : i32
    %21 = vector.broadcast %20 : i1 to vector<16x1xi1>
    %22 = vector.broadcast %21 : vector<16x1xi1> to vector<16x1xi1>
    %23 = arith.xori %19, %22 : vector<16x1xi1>
    %24 = arith.andi %23, %17 : vector<16x1xi1>
    %25 = vector.broadcast %13 : i32 to vector<16x1xi32>
    %26 = arith.addi %15, %25 : vector<16x1xi32>
    %27 = arith.select %24, %26, %15 : vector<16x1xi1>, vector<16x1xi32>
    %c0_i32_16 = arith.constant 0 : i32
    %28 = vector.broadcast %c0_i32_16 : i32 to vector<16x1xi32>
    %29 = arith.cmpi eq, %27, %28 : vector<16x1xi32>
    %30 = arith.truncf %10 : vector<16x128xf32> to vector<16x128xbf16>
    %cst_17 = arith.constant dense<0.000000e+00> : vector<16x128xf32>
    %31 = tpu.matmul %5, %30, %cst_17 {dimension_numbers = #tpu.dot_dimension_numbers<[1], [0], [0], [1], [0, 0, 1, 1], [], []>} : vector<16x16xbf16>, vector<16x128xbf16>, vector<16x128xf32> -> vector<16x128xf32>
    %c0_18 = arith.constant 0 : index
    %c0_19 = arith.constant 0 : index
    %32 = vector.load %arg13[%c0_18, %c0_19] : memref<16x128xf32, #tpu.memory_space<vmem>>, vector<16x128xf32>
    tpu.vector_store %arg13[%c0_18, %c0_19], %31 {strides = array<i32>} : memref<16x128xf32, #tpu.memory_space<vmem>>, vector<16x128xf32>,
    %33 = arith.index_cast %arg0 : i32 to index
    %c0_20 = arith.constant 0 : index
    %34 = memref.load %arg1[%33, %c0_20] : memref<2x16xi32, #tpu.memory_space<smem>>
    %35 = arith.index_cast %34 : i32 to index
    %c0_21 = arith.constant 0 : index
    %36 = vector.load %arg13[%35, %c0_21] : memref<16x128xf32, #tpu.memory_space<vmem>>, vector<1x128xf32>
    %c0_22 = arith.constant 0 : index
    %c0_23 = arith.constant 0 : index
    %37 = vector.load %arg14[%c0_22, %c0_23] : memref<16x128xf32, #tpu.memory_space<vmem>>, vector<1x128xf32>
    tpu.vector_store %arg14[%c0_22, %c0_23], %36 {strides = array<i32>} : memref<16x128xf32, #tpu.memory_space<vmem>>, vector<1x128xf32>,
    %38 = arith.index_cast %arg0 : i32 to index
    %c1 = arith.constant 1 : index
    %39 = memref.load %arg1[%38, %c1] : memref<2x16xi32, #tpu.memory_space<smem>>
    %40 = arith.index_cast %39 : i32 to index
    %c0_24 = arith.constant 0 : index
    %41 = vector.load %arg13[%40, %c0_24] : memref<16x128xf32, #tpu.memory_space<vmem>>, vector<1x128xf32>
    %c1_25 = arith.constant 1 : index
    %c0_26 = arith.constant 0 : index
    %42 = vector.load %arg14[%c1_25, %c0_26] : memref<16x128xf32, #tpu.memory_space<vmem>>, vector<1x128xf32>
    tpu.vector_store %arg14[%c1_25, %c0_26], %41 {strides = array<i32>} : memref<16x128xf32, #tpu.memory_space<vmem>>, vector<1x128xf32>,
    %43 = arith.index_cast %arg0 : i32 to index
    %c2 = arith.constant 2 : index
    %44 = memref.load %arg1[%43, %c2] : memref<2x16xi32, #tpu.memory_space<smem>>
    %45 = arith.index_cast %44 : i32 to index
    %c0_27 = arith.constant 0 : index
    %46 = vector.load %arg13[%45, %c0_27] : memref<16x128xf32, #tpu.memory_space<vmem>>, vector<1x128xf32>
    %c2_28 = arith.constant 2 : index
    %c0_29 = arith.constant 0 : index
    %47 = vector.load %arg14[%c2_28, %c0_29] : memref<16x128xf32, #tpu.memory_space<vmem>>, vector<1x128xf32>
    tpu.vector_store %arg14[%c2_28, %c0_29], %46 {strides = array<i32>} : memref<16x128xf32, #tpu.memory_space<vmem>>, vector<1x128xf32>,
    %48 = arith.index_cast %arg0 : i32 to index
    %c3 = arith.constant 3 : index
    %49 = memref.load %arg1[%48, %c3] : memref<2x16xi32, #tpu.memory_space<smem>>
    %50 = arith.index_cast %49 : i32 to index
    %c0_30 = arith.constant 0 : index
    %51 = vector.load %arg13[%50, %c0_30] : memref<16x128xf32, #tpu.memory_space<vmem>>, vector<1x128xf32>
    %c3_31 = arith.constant 3 : index
    %c0_32 = arith.constant 0 : index
    %52 = vector.load %arg14[%c3_31, %c0_32] : memref<16x128xf32, #tpu.memory_space<vmem>>, vector<1x128xf32>
    tpu.vector_store %arg14[%c3_31, %c0_32], %51 {strides = array<i32>} : memref<16x128xf32, #tpu.memory_space<vmem>>, vector<1x128xf32>,
    %53 = arith.index_cast %arg0 : i32 to index
    %c4 = arith.constant 4 : index
    %54 = memref.load %arg1[%53, %c4] : memref<2x16xi32, #tpu.memory_space<smem>>
    %55 = arith.index_cast %54 : i32 to index
    %c0_33 = arith.constant 0 : index
    %56 = vector.load %arg13[%55, %c0_33] : memref<16x128xf32, #tpu.memory_space<vmem>>, vector<1x128xf32>
    %c4_34 = arith.constant 4 : index
    %c0_35 = arith.constant 0 : index
    %57 = vector.load %arg14[%c4_34, %c0_35] : memref<16x128xf32, #tpu.memory_space<vmem>>, vector<1x128xf32>
    tpu.vector_store %arg14[%c4_34, %c0_35], %56 {strides = array<i32>} : memref<16x128xf32, #tpu.memory_space<vmem>>, vector<1x128xf32>,
    %58 = arith.index_cast %arg0 : i32 to index
    %c5 = arith.constant 5 : index
    %59 = memref.load %arg1[%58, %c5] : memref<2x16xi32, #tpu.memory_space<smem>>
    %60 = arith.index_cast %59 : i32 to index
    %c0_36 = arith.constant 0 : index
    %61 = vector.load %arg13[%60, %c0_36] : memref<16x128xf32, #tpu.memory_space<vmem>>, vector<1x128xf32>
    %c5_37 = arith.constant 5 : index
    %c0_38 = arith.constant 0 : index
    %62 = vector.load %arg14[%c5_37, %c0_38] : memref<16x128xf32, #tpu.memory_space<vmem>>, vector<1x128xf32>
    tpu.vector_store %arg14[%c5_37, %c0_38], %61 {strides = array<i32>} : memref<16x128xf32, #tpu.memory_space<vmem>>, vector<1x128xf32>,
    %63 = arith.index_cast %arg0 : i32 to index
    %c6 = arith.constant 6 : index
    %64 = memref.load %arg1[%63, %c6] : memref<2x16xi32, #tpu.memory_space<smem>>
    %65 = arith.index_cast %64 : i32 to index
    %c0_39 = arith.constant 0 : index
    %66 = vector.load %arg13[%65, %c0_39] : memref<16x128xf32, #tpu.memory_space<vmem>>, vector<1x128xf32>
    %c6_40 = arith.constant 6 : index
    %c0_41 = arith.constant 0 : index
    %67 = vector.load %arg14[%c6_40, %c0_41] : memref<16x128xf32, #tpu.memory_space<vmem>>, vector<1x128xf32>
    tpu.vector_store %arg14[%c6_40, %c0_41], %66 {strides = array<i32>} : memref<16x128xf32, #tpu.memory_space<vmem>>, vector<1x128xf32>,
    %68 = arith.index_cast %arg0 : i32 to index
    %c7 = arith.constant 7 : index
    %69 = memref.load %arg1[%68, %c7] : memref<2x16xi32, #tpu.memory_space<smem>>
    %70 = arith.index_cast %69 : i32 to index
    %c0_42 = arith.constant 0 : index
    %71 = vector.load %arg13[%70, %c0_42] : memref<16x128xf32, #tpu.memory_space<vmem>>, vector<1x128xf32>
    %c7_43 = arith.constant 7 : index
    %c0_44 = arith.constant 0 : index
    %72 = vector.load %arg14[%c7_43, %c0_44] : memref<16x128xf32, #tpu.memory_space<vmem>>, vector<1x128xf32>
    tpu.vector_store %arg14[%c7_43, %c0_44], %71 {strides = array<i32>} : memref<16x128xf32, #tpu.memory_space<vmem>>, vector<1x128xf32>,
    %73 = arith.index_cast %arg0 : i32 to index
    %c8 = arith.constant 8 : index
    %74 = memref.load %arg1[%73, %c8] : memref<2x16xi32, #tpu.memory_space<smem>>
    %75 = arith.index_cast %74 : i32 to index
    %c0_45 = arith.constant 0 : index
    %76 = vector.load %arg13[%75, %c0_45] : memref<16x128xf32, #tpu.memory_space<vmem>>, vector<1x128xf32>
    %c8_46 = arith.constant 8 : index
    %c0_47 = arith.constant 0 : index
    %77 = vector.load %arg14[%c8_46, %c0_47] : memref<16x128xf32, #tpu.memory_space<vmem>>, vector<1x128xf32>
    tpu.vector_store %arg14[%c8_46, %c0_47], %76 {strides = array<i32>} : memref<16x128xf32, #tpu.memory_space<vmem>>, vector<1x128xf32>,
    %78 = arith.index_cast %arg0 : i32 to index
    %c9 = arith.constant 9 : index
    %79 = memref.load %arg1[%78, %c9] : memref<2x16xi32, #tpu.memory_space<smem>>
    %80 = arith.index_cast %79 : i32 to index
    %c0_48 = arith.constant 0 : index
    %81 = vector.load %arg13[%80, %c0_48] : memref<16x128xf32, #tpu.memory_space<vmem>>, vector<1x128xf32>
    %c9_49 = arith.constant 9 : index
    %c0_50 = arith.constant 0 : index
    %82 = vector.load %arg14[%c9_49, %c0_50] : memref<16x128xf32, #tpu.memory_space<vmem>>, vector<1x128xf32>
    tpu.vector_store %arg14[%c9_49, %c0_50], %81 {strides = array<i32>} : memref<16x128xf32, #tpu.memory_space<vmem>>, vector<1x128xf32>,
    %83 = arith.index_cast %arg0 : i32 to index
    %c10 = arith.constant 10 : index
    %84 = memref.load %arg1[%83, %c10] : memref<2x16xi32, #tpu.memory_space<smem>>
    %85 = arith.index_cast %84 : i32 to index
    %c0_51 = arith.constant 0 : index
    %86 = vector.load %arg13[%85, %c0_51] : memref<16x128xf32, #tpu.memory_space<vmem>>, vector<1x128xf32>
    %c10_52 = arith.constant 10 : index
    %c0_53 = arith.constant 0 : index
    %87 = vector.load %arg14[%c10_52, %c0_53] : memref<16x128xf32, #tpu.memory_space<vmem>>, vector<1x128xf32>
    tpu.vector_store %arg14[%c10_52, %c0_53], %86 {strides = array<i32>} : memref<16x128xf32, #tpu.memory_space<vmem>>, vector<1x128xf32>,
    %88 = arith.index_cast %arg0 : i32 to index
    %c11 = arith.constant 11 : index
    %89 = memref.load %arg1[%88, %c11] : memref<2x16xi32, #tpu.memory_space<smem>>
    %90 = arith.index_cast %89 : i32 to index
    %c0_54 = arith.constant 0 : index
    %91 = vector.load %arg13[%90, %c0_54] : memref<16x128xf32, #tpu.memory_space<vmem>>, vector<1x128xf32>
    %c11_55 = arith.constant 11 : index
    %c0_56 = arith.constant 0 : index
    %92 = vector.load %arg14[%c11_55, %c0_56] : memref<16x128xf32, #tpu.memory_space<vmem>>, vector<1x128xf32>
    tpu.vector_store %arg14[%c11_55, %c0_56], %91 {strides = array<i32>} : memref<16x128xf32, #tpu.memory_space<vmem>>, vector<1x128xf32>,
    %93 = arith.index_cast %arg0 : i32 to index
    %c12 = arith.constant 12 : index
    %94 = memref.load %arg1[%93, %c12] : memref<2x16xi32, #tpu.memory_space<smem>>
    %95 = arith.index_cast %94 : i32 to index
    %c0_57 = arith.constant 0 : index
    %96 = vector.load %arg13[%95, %c0_57] : memref<16x128xf32, #tpu.memory_space<vmem>>, vector<1x128xf32>
    %c12_58 = arith.constant 12 : index
    %c0_59 = arith.constant 0 : index
    %97 = vector.load %arg14[%c12_58, %c0_59] : memref<16x128xf32, #tpu.memory_space<vmem>>, vector<1x128xf32>
    tpu.vector_store %arg14[%c12_58, %c0_59], %96 {strides = array<i32>} : memref<16x128xf32, #tpu.memory_space<vmem>>, vector<1x128xf32>,
    %98 = arith.index_cast %arg0 : i32 to index
    %c13 = arith.constant 13 : index
    %99 = memref.load %arg1[%98, %c13] : memref<2x16xi32, #tpu.memory_space<smem>>
    %100 = arith.index_cast %99 : i32 to index
    %c0_60 = arith.constant 0 : index
    %101 = vector.load %arg13[%100, %c0_60] : memref<16x128xf32, #tpu.memory_space<vmem>>, vector<1x128xf32>
    %c13_61 = arith.constant 13 : index
    %c0_62 = arith.constant 0 : index
    %102 = vector.load %arg14[%c13_61, %c0_62] : memref<16x128xf32, #tpu.memory_space<vmem>>, vector<1x128xf32>
    tpu.vector_store %arg14[%c13_61, %c0_62], %101 {strides = array<i32>} : memref<16x128xf32, #tpu.memory_space<vmem>>, vector<1x128xf32>,
    %103 = arith.index_cast %arg0 : i32 to index
    %c14 = arith.constant 14 : index
    %104 = memref.load %arg1[%103, %c14] : memref<2x16xi32, #tpu.memory_space<smem>>
    %105 = arith.index_cast %104 : i32 to index
    %c0_63 = arith.constant 0 : index
    %106 = vector.load %arg13[%105, %c0_63] : memref<16x128xf32, #tpu.memory_space<vmem>>, vector<1x128xf32>
    %c14_64 = arith.constant 14 : index
    %c0_65 = arith.constant 0 : index
    %107 = vector.load %arg14[%c14_64, %c0_65] : memref<16x128xf32, #tpu.memory_space<vmem>>, vector<1x128xf32>
    tpu.vector_store %arg14[%c14_64, %c0_65], %106 {strides = array<i32>} : memref<16x128xf32, #tpu.memory_space<vmem>>, vector<1x128xf32>,
    %108 = arith.index_cast %arg0 : i32 to index
    %c15 = arith.constant 15 : index
    %109 = memref.load %arg1[%108, %c15] : memref<2x16xi32, #tpu.memory_space<smem>>
    %110 = arith.index_cast %109 : i32 to index
    %c0_66 = arith.constant 0 : index
    %111 = vector.load %arg13[%110, %c0_66] : memref<16x128xf32, #tpu.memory_space<vmem>>, vector<1x128xf32>
    %c15_67 = arith.constant 15 : index
    %c0_68 = arith.constant 0 : index
    %112 = vector.load %arg14[%c15_67, %c0_68] : memref<16x128xf32, #tpu.memory_space<vmem>>, vector<1x128xf32>
    tpu.vector_store %arg14[%c15_67, %c0_68], %111 {strides = array<i32>} : memref<16x128xf32, #tpu.memory_space<vmem>>, vector<1x128xf32>,
    %c15_i32 = arith.constant 15 : i32
    %113 = tpu.dynamic_rotate %10 by %c15_i32 dim 0 : vector<16x128xf32>, i32 -> vector<16x128xf32>
    %c1_i32_69 = arith.constant 1 : i32
    %114 = tpu.dynamic_rotate %10 by %c1_i32_69 dim 0 : vector<16x128xf32>, i32 -> vector<16x128xf32>
    %115 = vector.shape_cast %29 : vector<16x1xi1> to vector<16x1xi1>
    %116 = vector.broadcast %115 : vector<16x1xi1> to vector<16x128xi1>
    %117 = arith.select %116, %113, %114 : vector<16x128xi1>, vector<16x128xf32>
    %c0_70 = arith.constant 0 : index
    %c0_71 = arith.constant 0 : index
    %118 = vector.load %arg14[%c0_70, %c0_71] : memref<16x128xf32, #tpu.memory_space<vmem>>, vector<16x128xf32>
    %119 = arith.subf %118, %117 : vector<16x128xf32>
    %120 = arith.truncf %119 : vector<16x128xf32> to vector<16x128xbf16>
    %cst_72 = arith.constant dense<0.000000e+00> : vector<16x128xf32>
    %121 = tpu.matmul %120, %7, %cst_72 {dimension_numbers = #tpu.dot_dimension_numbers<[1], [0], [0], [1], [0, 0, 1, 1], [], []>} : vector<16x128xbf16>, vector<128x128xbf16>, vector<16x128xf32> -> vector<16x128xf32>
    %122 = arith.addf %8, %121 : vector<16x128xf32>
    %cst_73 = arith.constant 0.000000e+00 : f32
    %123 = vector.broadcast %cst_73 : f32 to vector<16x128xf32>
    %124 = arith.maximumf %122, %123 : vector<16x128xf32>
    %125 = arith.truncf %124 : vector<16x128xf32> to vector<16x128xbf16>
    %cst_74 = arith.constant dense<0.000000e+00> : vector<16x128xf32>
    %126 = tpu.matmul %5, %125, %cst_74 {dimension_numbers = #tpu.dot_dimension_numbers<[1], [0], [0], [1], [0, 0, 1, 1], [], []>} : vector<16x16xbf16>, vector<16x128xbf16>, vector<16x128xf32> -> vector<16x128xf32>
    %c0_75 = arith.constant 0 : index
    %c0_76 = arith.constant 0 : index
    %127 = vector.load %arg13[%c0_75, %c0_76] : memref<16x128xf32, #tpu.memory_space<vmem>>, vector<16x128xf32>
    tpu.vector_store %arg13[%c0_75, %c0_76], %126 {strides = array<i32>} : memref<16x128xf32, #tpu.memory_space<vmem>>, vector<16x128xf32>,
    %128 = arith.index_cast %arg0 : i32 to index
    %c0_77 = arith.constant 0 : index
    %129 = memref.load %arg1[%128, %c0_77] : memref<2x16xi32, #tpu.memory_space<smem>>
    %130 = arith.index_cast %129 : i32 to index
    %c0_78 = arith.constant 0 : index
    %131 = vector.load %arg13[%130, %c0_78] : memref<16x128xf32, #tpu.memory_space<vmem>>, vector<1x128xf32>
    %c0_79 = arith.constant 0 : index
    %c0_80 = arith.constant 0 : index
    %132 = vector.load %arg14[%c0_79, %c0_80] : memref<16x128xf32, #tpu.memory_space<vmem>>, vector<1x128xf32>
    tpu.vector_store %arg14[%c0_79, %c0_80], %131 {strides = array<i32>} : memref<16x128xf32, #tpu.memory_space<vmem>>, vector<1x128xf32>,
    %133 = arith.index_cast %arg0 : i32 to index
    %c1_81 = arith.constant 1 : index
    %134 = memref.load %arg1[%133, %c1_81] : memref<2x16xi32, #tpu.memory_space<smem>>
    %135 = arith.index_cast %134 : i32 to index
    %c0_82 = arith.constant 0 : index
    %136 = vector.load %arg13[%135, %c0_82] : memref<16x128xf32, #tpu.memory_space<vmem>>, vector<1x128xf32>
    %c1_83 = arith.constant 1 : index
    %c0_84 = arith.constant 0 : index
    %137 = vector.load %arg14[%c1_83, %c0_84] : memref<16x128xf32, #tpu.memory_space<vmem>>, vector<1x128xf32>
    tpu.vector_store %arg14[%c1_83, %c0_84], %136 {strides = array<i32>} : memref<16x128xf32, #tpu.memory_space<vmem>>, vector<1x128xf32>,
    %138 = arith.index_cast %arg0 : i32 to index
    %c2_85 = arith.constant 2 : index
    %139 = memref.load %arg1[%138, %c2_85] : memref<2x16xi32, #tpu.memory_space<smem>>
    %140 = arith.index_cast %139 : i32 to index
    %c0_86 = arith.constant 0 : index
    %141 = vector.load %arg13[%140, %c0_86] : memref<16x128xf32, #tpu.memory_space<vmem>>, vector<1x128xf32>
    %c2_87 = arith.constant 2 : index
    %c0_88 = arith.constant 0 : index
    %142 = vector.load %arg14[%c2_87, %c0_88] : memref<16x128xf32, #tpu.memory_space<vmem>>, vector<1x128xf32>
    tpu.vector_store %arg14[%c2_87, %c0_88], %141 {strides = array<i32>} : memref<16x128xf32, #tpu.memory_space<vmem>>, vector<1x128xf32>,
    %143 = arith.index_cast %arg0 : i32 to index
    %c3_89 = arith.constant 3 : index
    %144 = memref.load %arg1[%143, %c3_89] : memref<2x16xi32, #tpu.memory_space<smem>>
    %145 = arith.index_cast %144 : i32 to index
    %c0_90 = arith.constant 0 : index
    %146 = vector.load %arg13[%145, %c0_90] : memref<16x128xf32, #tpu.memory_space<vmem>>, vector<1x128xf32>
    %c3_91 = arith.constant 3 : index
    %c0_92 = arith.constant 0 : index
    %147 = vector.load %arg14[%c3_91, %c0_92] : memref<16x128xf32, #tpu.memory_space<vmem>>, vector<1x128xf32>
    tpu.vector_store %arg14[%c3_91, %c0_92], %146 {strides = array<i32>} : memref<16x128xf32, #tpu.memory_space<vmem>>, vector<1x128xf32>,
    %148 = arith.index_cast %arg0 : i32 to index
    %c4_93 = arith.constant 4 : index
    %149 = memref.load %arg1[%148, %c4_93] : memref<2x16xi32, #tpu.memory_space<smem>>
    %150 = arith.index_cast %149 : i32 to index
    %c0_94 = arith.constant 0 : index
    %151 = vector.load %arg13[%150, %c0_94] : memref<16x128xf32, #tpu.memory_space<vmem>>, vector<1x128xf32>
    %c4_95 = arith.constant 4 : index
    %c0_96 = arith.constant 0 : index
    %152 = vector.load %arg14[%c4_95, %c0_96] : memref<16x128xf32, #tpu.memory_space<vmem>>, vector<1x128xf32>
    tpu.vector_store %arg14[%c4_95, %c0_96], %151 {strides = array<i32>} : memref<16x128xf32, #tpu.memory_space<vmem>>, vector<1x128xf32>,
    %153 = arith.index_cast %arg0 : i32 to index
    %c5_97 = arith.constant 5 : index
    %154 = memref.load %arg1[%153, %c5_97] : memref<2x16xi32, #tpu.memory_space<smem>>
    %155 = arith.index_cast %154 : i32 to index
    %c0_98 = arith.constant 0 : index
    %156 = vector.load %arg13[%155, %c0_98] : memref<16x128xf32, #tpu.memory_space<vmem>>, vector<1x128xf32>
    %c5_99 = arith.constant 5 : index
    %c0_100 = arith.constant 0 : index
    %157 = vector.load %arg14[%c5_99, %c0_100] : memref<16x128xf32, #tpu.memory_space<vmem>>, vector<1x128xf32>
    tpu.vector_store %arg14[%c5_99, %c0_100], %156 {strides = array<i32>} : memref<16x128xf32, #tpu.memory_space<vmem>>, vector<1x128xf32>,
    %158 = arith.index_cast %arg0 : i32 to index
    %c6_101 = arith.constant 6 : index
    %159 = memref.load %arg1[%158, %c6_101] : memref<2x16xi32, #tpu.memory_space<smem>>
    %160 = arith.index_cast %159 : i32 to index
    %c0_102 = arith.constant 0 : index
    %161 = vector.load %arg13[%160, %c0_102] : memref<16x128xf32, #tpu.memory_space<vmem>>, vector<1x128xf32>
    %c6_103 = arith.constant 6 : index
    %c0_104 = arith.constant 0 : index
    %162 = vector.load %arg14[%c6_103, %c0_104] : memref<16x128xf32, #tpu.memory_space<vmem>>, vector<1x128xf32>
    tpu.vector_store %arg14[%c6_103, %c0_104], %161 {strides = array<i32>} : memref<16x128xf32, #tpu.memory_space<vmem>>, vector<1x128xf32>,
    %163 = arith.index_cast %arg0 : i32 to index
    %c7_105 = arith.constant 7 : index
    %164 = memref.load %arg1[%163, %c7_105] : memref<2x16xi32, #tpu.memory_space<smem>>
    %165 = arith.index_cast %164 : i32 to index
    %c0_106 = arith.constant 0 : index
    %166 = vector.load %arg13[%165, %c0_106] : memref<16x128xf32, #tpu.memory_space<vmem>>, vector<1x128xf32>
    %c7_107 = arith.constant 7 : index
    %c0_108 = arith.constant 0 : index
    %167 = vector.load %arg14[%c7_107, %c0_108] : memref<16x128xf32, #tpu.memory_space<vmem>>, vector<1x128xf32>
    tpu.vector_store %arg14[%c7_107, %c0_108], %166 {strides = array<i32>} : memref<16x128xf32, #tpu.memory_space<vmem>>, vector<1x128xf32>,
    %168 = arith.index_cast %arg0 : i32 to index
    %c8_109 = arith.constant 8 : index
    %169 = memref.load %arg1[%168, %c8_109] : memref<2x16xi32, #tpu.memory_space<smem>>
    %170 = arith.index_cast %169 : i32 to index
    %c0_110 = arith.constant 0 : index
    %171 = vector.load %arg13[%170, %c0_110] : memref<16x128xf32, #tpu.memory_space<vmem>>, vector<1x128xf32>
    %c8_111 = arith.constant 8 : index
    %c0_112 = arith.constant 0 : index
    %172 = vector.load %arg14[%c8_111, %c0_112] : memref<16x128xf32, #tpu.memory_space<vmem>>, vector<1x128xf32>
    tpu.vector_store %arg14[%c8_111, %c0_112], %171 {strides = array<i32>} : memref<16x128xf32, #tpu.memory_space<vmem>>, vector<1x128xf32>,
    %173 = arith.index_cast %arg0 : i32 to index
    %c9_113 = arith.constant 9 : index
    %174 = memref.load %arg1[%173, %c9_113] : memref<2x16xi32, #tpu.memory_space<smem>>
    %175 = arith.index_cast %174 : i32 to index
    %c0_114 = arith.constant 0 : index
    %176 = vector.load %arg13[%175, %c0_114] : memref<16x128xf32, #tpu.memory_space<vmem>>, vector<1x128xf32>
    %c9_115 = arith.constant 9 : index
    %c0_116 = arith.constant 0 : index
    %177 = vector.load %arg14[%c9_115, %c0_116] : memref<16x128xf32, #tpu.memory_space<vmem>>, vector<1x128xf32>
    tpu.vector_store %arg14[%c9_115, %c0_116], %176 {strides = array<i32>} : memref<16x128xf32, #tpu.memory_space<vmem>>, vector<1x128xf32>,
    %178 = arith.index_cast %arg0 : i32 to index
    %c10_117 = arith.constant 10 : index
    %179 = memref.load %arg1[%178, %c10_117] : memref<2x16xi32, #tpu.memory_space<smem>>
    %180 = arith.index_cast %179 : i32 to index
    %c0_118 = arith.constant 0 : index
    %181 = vector.load %arg13[%180, %c0_118] : memref<16x128xf32, #tpu.memory_space<vmem>>, vector<1x128xf32>
    %c10_119 = arith.constant 10 : index
    %c0_120 = arith.constant 0 : index
    %182 = vector.load %arg14[%c10_119, %c0_120] : memref<16x128xf32, #tpu.memory_space<vmem>>, vector<1x128xf32>
    tpu.vector_store %arg14[%c10_119, %c0_120], %181 {strides = array<i32>} : memref<16x128xf32, #tpu.memory_space<vmem>>, vector<1x128xf32>,
    %183 = arith.index_cast %arg0 : i32 to index
    %c11_121 = arith.constant 11 : index
    %184 = memref.load %arg1[%183, %c11_121] : memref<2x16xi32, #tpu.memory_space<smem>>
    %185 = arith.index_cast %184 : i32 to index
    %c0_122 = arith.constant 0 : index
    %186 = vector.load %arg13[%185, %c0_122] : memref<16x128xf32, #tpu.memory_space<vmem>>, vector<1x128xf32>
    %c11_123 = arith.constant 11 : index
    %c0_124 = arith.constant 0 : index
    %187 = vector.load %arg14[%c11_123, %c0_124] : memref<16x128xf32, #tpu.memory_space<vmem>>, vector<1x128xf32>
    tpu.vector_store %arg14[%c11_123, %c0_124], %186 {strides = array<i32>} : memref<16x128xf32, #tpu.memory_space<vmem>>, vector<1x128xf32>,
    %188 = arith.index_cast %arg0 : i32 to index
    %c12_125 = arith.constant 12 : index
    %189 = memref.load %arg1[%188, %c12_125] : memref<2x16xi32, #tpu.memory_space<smem>>
    %190 = arith.index_cast %189 : i32 to index
    %c0_126 = arith.constant 0 : index
    %191 = vector.load %arg13[%190, %c0_126] : memref<16x128xf32, #tpu.memory_space<vmem>>, vector<1x128xf32>
    %c12_127 = arith.constant 12 : index
    %c0_128 = arith.constant 0 : index
    %192 = vector.load %arg14[%c12_127, %c0_128] : memref<16x128xf32, #tpu.memory_space<vmem>>, vector<1x128xf32>
    tpu.vector_store %arg14[%c12_127, %c0_128], %191 {strides = array<i32>} : memref<16x128xf32, #tpu.memory_space<vmem>>, vector<1x128xf32>,
    %193 = arith.index_cast %arg0 : i32 to index
    %c13_129 = arith.constant 13 : index
    %194 = memref.load %arg1[%193, %c13_129] : memref<2x16xi32, #tpu.memory_space<smem>>
    %195 = arith.index_cast %194 : i32 to index
    %c0_130 = arith.constant 0 : index
    %196 = vector.load %arg13[%195, %c0_130] : memref<16x128xf32, #tpu.memory_space<vmem>>, vector<1x128xf32>
    %c13_131 = arith.constant 13 : index
    %c0_132 = arith.constant 0 : index
    %197 = vector.load %arg14[%c13_131, %c0_132] : memref<16x128xf32, #tpu.memory_space<vmem>>, vector<1x128xf32>
    tpu.vector_store %arg14[%c13_131, %c0_132], %196 {strides = array<i32>} : memref<16x128xf32, #tpu.memory_space<vmem>>, vector<1x128xf32>,
    %198 = arith.index_cast %arg0 : i32 to index
    %c14_133 = arith.constant 14 : index
    %199 = memref.load %arg1[%198, %c14_133] : memref<2x16xi32, #tpu.memory_space<smem>>
    %200 = arith.index_cast %199 : i32 to index
    %c0_134 = arith.constant 0 : index
    %201 = vector.load %arg13[%200, %c0_134] : memref<16x128xf32, #tpu.memory_space<vmem>>, vector<1x128xf32>
    %c14_135 = arith.constant 14 : index
    %c0_136 = arith.constant 0 : index
    %202 = vector.load %arg14[%c14_135, %c0_136] : memref<16x128xf32, #tpu.memory_space<vmem>>, vector<1x128xf32>
    tpu.vector_store %arg14[%c14_135, %c0_136], %201 {strides = array<i32>} : memref<16x128xf32, #tpu.memory_space<vmem>>, vector<1x128xf32>,
    %203 = arith.index_cast %arg0 : i32 to index
    %c15_137 = arith.constant 15 : index
    %204 = memref.load %arg1[%203, %c15_137] : memref<2x16xi32, #tpu.memory_space<smem>>
    %205 = arith.index_cast %204 : i32 to index
    %c0_138 = arith.constant 0 : index
    %206 = vector.load %arg13[%205, %c0_138] : memref<16x128xf32, #tpu.memory_space<vmem>>, vector<1x128xf32>
    %c15_139 = arith.constant 15 : index
    %c0_140 = arith.constant 0 : index
    %207 = vector.load %arg14[%c15_139, %c0_140] : memref<16x128xf32, #tpu.memory_space<vmem>>, vector<1x128xf32>
    tpu.vector_store %arg14[%c15_139, %c0_140], %206 {strides = array<i32>} : memref<16x128xf32, #tpu.memory_space<vmem>>, vector<1x128xf32>,
    %c15_i32_141 = arith.constant 15 : i32
    %208 = tpu.dynamic_rotate %124 by %c15_i32_141 dim 0 : vector<16x128xf32>, i32 -> vector<16x128xf32>
    %c1_i32_142 = arith.constant 1 : i32
    %209 = tpu.dynamic_rotate %124 by %c1_i32_142 dim 0 : vector<16x128xf32>, i32 -> vector<16x128xf32>
    %210 = vector.shape_cast %29 : vector<16x1xi1> to vector<16x1xi1>
    %211 = vector.broadcast %210 : vector<16x1xi1> to vector<16x128xi1>
    %212 = arith.select %211, %208, %209 : vector<16x128xi1>, vector<16x128xf32>
    %c0_143 = arith.constant 0 : index
    %c0_144 = arith.constant 0 : index
    %213 = vector.load %arg14[%c0_143, %c0_144] : memref<16x128xf32, #tpu.memory_space<vmem>>, vector<16x128xf32>
    %214 = arith.subf %213, %212 : vector<16x128xf32>
    %215 = arith.truncf %214 : vector<16x128xf32> to vector<16x128xbf16>
    %cst_145 = arith.constant dense<0.000000e+00> : vector<16x128xf32>
    %216 = tpu.matmul %215, %7, %cst_145 {dimension_numbers = #tpu.dot_dimension_numbers<[1], [0], [0], [1], [0, 0, 1, 1], [], []>} : vector<16x128xbf16>, vector<128x128xbf16>, vector<16x128xf32> -> vector<16x128xf32>
    %217 = arith.addf %8, %216 : vector<16x128xf32>
    %cst_146 = arith.constant 0.000000e+00 : f32
    %218 = vector.broadcast %cst_146 : f32 to vector<16x128xf32>
    %219 = arith.maximumf %217, %218 : vector<16x128xf32>
    %220 = arith.truncf %219 : vector<16x128xf32> to vector<16x128xbf16>
    %cst_147 = arith.constant dense<0.000000e+00> : vector<16x128xf32>
    %221 = tpu.matmul %5, %220, %cst_147 {dimension_numbers = #tpu.dot_dimension_numbers<[1], [0], [0], [1], [0, 0, 1, 1], [], []>} : vector<16x16xbf16>, vector<16x128xbf16>, vector<16x128xf32> -> vector<16x128xf32>
    %c0_148 = arith.constant 0 : index
    %c0_149 = arith.constant 0 : index
    %222 = vector.load %arg9[%c0_148, %c0_149] : memref<128x128xbf16, #tpu.memory_space<vmem>>, vector<128x128xbf16>
    %cst_150 = arith.constant dense<0.000000e+00> : vector<16x128xf32>
    %223 = tpu.matmul %1, %222, %cst_150 {dimension_numbers = #tpu.dot_dimension_numbers<[1], [0], [0], [1], [0, 0, 1, 1], [], []>} : vector<16x128xbf16>, vector<128x128xbf16>, vector<16x128xf32> -> vector<16x128xf32>
    %224 = arith.truncf %221 : vector<16x128xf32> to vector<16x128xbf16>
    %c0_151 = arith.constant 0 : index
    %c0_152 = arith.constant 0 : index
    %225 = vector.load %arg10[%c0_151, %c0_152] : memref<128x128xbf16, #tpu.memory_space<vmem>>, vector<128x128xbf16>
    %cst_153 = arith.constant dense<0.000000e+00> : vector<16x128xf32>
    %226 = tpu.matmul %224, %225, %cst_153 {dimension_numbers = #tpu.dot_dimension_numbers<[1], [0], [0], [1], [0, 0, 1, 1], [], []>} : vector<16x128xbf16>, vector<128x128xbf16>, vector<16x128xf32> -> vector<16x128xf32>
    %227 = arith.addf %223, %226 : vector<16x128xf32>
    %c0_154 = arith.constant 0 : index
    %c0_155 = arith.constant 0 : index
    %228 = vector.load %arg11[%c0_154, %c0_155] : memref<1x128xf32, #tpu.memory_space<vmem>>, vector<1x128xf32>
    %229 = vector.broadcast %228 : vector<1x128xf32> to vector<16x128xf32>
    %230 = arith.addf %227, %229 : vector<16x128xf32>
    %cst_156 = arith.constant 0.000000e+00 : f32
    %231 = vector.broadcast %cst_156 : f32 to vector<16x128xf32>
    %232 = arith.maximumf %230, %231 : vector<16x128xf32>
    %c0_157 = arith.constant 0 : index
    %c0_158 = arith.constant 0 : index
    %c0_159 = arith.constant 0 : index
    %233 = vector.load %arg5[%c0_157, %c0_158, %c0_159] : memref<1x8x16xbf16, #tpu.memory_space<vmem>>, vector<1x8x16xbf16>
    %234 = vector.shape_cast %233 : vector<1x8x16xbf16> to vector<8x16xbf16>
    %235 = arith.truncf %232 : vector<16x128xf32> to vector<16x128xbf16>
    %cst_160 = arith.constant dense<0.000000e+00> : vector<8x128xf32>
    %236 = tpu.matmul %234, %235, %cst_160 {dimension_numbers = #tpu.dot_dimension_numbers<[1], [0], [0], [1], [0, 0, 1, 1], [], []>} : vector<8x16xbf16>, vector<16x128xbf16>, vector<8x128xf32> -> vector<8x128xf32>
    %c0_161 = arith.constant 0 : index
    %c0_162 = arith.constant 0 : index
    %c0_163 = arith.constant 0 : index
    %237 = vector.load %arg6[%c0_161, %c0_162, %c0_163] : memref<1x8x1xf32, #tpu.memory_space<vmem>>, vector<1x8x1xf32>
    %238 = vector.shape_cast %237 : vector<1x8x1xf32> to vector<8x1xf32>
    %239 = vector.broadcast %238 : vector<8x1xf32> to vector<8x128xf32>
    %240 = arith.mulf %236, %239 : vector<8x128xf32>
    %c0_164 = arith.constant 0 : index
    %c0_165 = arith.constant 0 : index
    %c0_166 = arith.constant 0 : index
    %241 = vector.load %arg12[%c0_164, %c0_165, %c0_166] : memref<1x8x128xf32, #tpu.memory_space<vmem>>, vector<1x8x128xf32>
    %242 = vector.shape_cast %241 : vector<1x8x128xf32> to vector<8x128xf32>
    %243 = vector.shape_cast %240 : vector<8x128xf32> to vector<1x8x128xf32>
    tpu.vector_store %arg12[%c0_164, %c0_165, %c0_166], %243 {strides = array<i32>} : memref<1x8x128xf32, #tpu.memory_space<vmem>>, vector<1x8x128xf32>,
    return
  }
  func.func @transform_0(%arg0: i32, %arg1: memref<2x16xi32, #tpu.memory_space<smem>>) -> (i32, i32, i32) {
    %c0_i32 = arith.constant 0 : i32
    %c0_i32_0 = arith.constant 0 : i32
    %c0_i32_1 = arith.constant 0 : i32
    return %arg0, %c0_i32, %c0_i32_0 : i32, i32, i32
  }
  func.func @transform_1(%arg0: i32, %arg1: memref<2x16xi32, #tpu.memory_space<smem>>) -> (i32, i32, i32) {
    %c0_i32 = arith.constant 0 : i32
    %c0_i32_0 = arith.constant 0 : i32
    %c0_i32_1 = arith.constant 0 : i32
    return %arg0, %c0_i32, %c0_i32_0 : i32, i32, i32
  }
  func.func @transform_2(%arg0: i32, %arg1: memref<2x16xi32, #tpu.memory_space<smem>>) -> (i32, i32, i32) {
    %c0_i32 = arith.constant 0 : i32
    %c0_i32_0 = arith.constant 0 : i32
    %c0_i32_1 = arith.constant 0 : i32
    return %arg0, %c0_i32, %c0_i32_0 : i32, i32, i32
  }
  func.func @transform_3(%arg0: i32, %arg1: memref<2x16xi32, #tpu.memory_space<smem>>) -> (i32, i32, i32) {
    %c0_i32 = arith.constant 0 : i32
    %c0_i32_0 = arith.constant 0 : i32
    %c0_i32_1 = arith.constant 0 : i32
    return %arg0, %c0_i32, %c0_i32_0 : i32, i32, i32
  }
  func.func @transform_4(%arg0: i32, %arg1: memref<2x16xi32, #tpu.memory_space<smem>>) -> (i32, i32, i32) {
    %c0_i32 = arith.constant 0 : i32
    %c0_i32_0 = arith.constant 0 : i32
    %c0_i32_1 = arith.constant 0 : i32
    return %arg0, %c0_i32, %c0_i32_0 : i32, i32, i32
  }
  func.func @transform_5(%arg0: i32, %arg1: memref<2x16xi32, #tpu.memory_space<smem>>) -> (i32, i32) {
    %c0_i32 = arith.constant 0 : i32
    %c0_i32_0 = arith.constant 0 : i32
    %c0_i32_1 = arith.constant 0 : i32
    return %c0_i32, %c0_i32_0 : i32, i32
  }
  func.func @transform_6(%arg0: i32, %arg1: memref<2x16xi32, #tpu.memory_space<smem>>) -> (i32, i32) {
    %c0_i32 = arith.constant 0 : i32
    %c0_i32_0 = arith.constant 0 : i32
    %c0_i32_1 = arith.constant 0 : i32
    return %c0_i32, %c0_i32_0 : i32, i32
  }
  func.func @transform_7(%arg0: i32, %arg1: memref<2x16xi32, #tpu.memory_space<smem>>) -> (i32, i32) {
    %c0_i32 = arith.constant 0 : i32
    %c0_i32_0 = arith.constant 0 : i32
    %c0_i32_1 = arith.constant 0 : i32
    return %c0_i32, %c0_i32_0 : i32, i32
  }
  func.func @transform_8(%arg0: i32, %arg1: memref<2x16xi32, #tpu.memory_space<smem>>) -> (i32, i32) {
    %c0_i32 = arith.constant 0 : i32
    %c0_i32_0 = arith.constant 0 : i32
    %c0_i32_1 = arith.constant 0 : i32
    return %c0_i32, %c0_i32_0 : i32, i32
  }
  func.func @transform_9(%arg0: i32, %arg1: memref<2x16xi32, #tpu.memory_space<smem>>) -> (i32, i32) {
    %c0_i32 = arith.constant 0 : i32
    %c0_i32_0 = arith.constant 0 : i32
    %c0_i32_1 = arith.constant 0 : i32
    return %c0_i32, %c0_i32_0 : i32, i32
  }
  func.func @transform_10(%arg0: i32, %arg1: memref<2x16xi32, #tpu.memory_space<smem>>) -> (i32, i32, i32) {
    %c0_i32 = arith.constant 0 : i32
    %c0_i32_0 = arith.constant 0 : i32
    %c0_i32_1 = arith.constant 0 : i32
    return %arg0, %c0_i32, %c0_i32_0 : i32, i32, i32
  }
}

</mosaic_0001>

<llo_original>
// kernel: tpu_custom_call.1
$region0: #{tpu_custom_call.1}
  #allocation0 [shape = 'u32[]', space=smem, size = 0x4, offset = 0x4, fixed_abs, tag = 'smem constant byte address 0x4 - core index']
  #allocation1 [shape = 'u32[144,128]{1,0:T(1,128)}', space=vmem, size = 0x12000, scoped, tag = 'internal scratch']
  #allocation2 [shape = 'f32[16,128]{1,0:T(8,128)}', space=vmem, size = 0x2000, scoped, tag = 'scratch operand']
  #allocation3 [shape = 'f32[16,128]{1,0:T(8,128)}', space=vmem, size = 0x2000, scoped, tag = 'scratch operand']
  #allocation4 [shape = 's32[1]{0}', space=sflag, size = 0x4, scoped, tag = 'scoped memory for tpu_custom_call.1']
  #allocation5 [shape = 'u8[1024]{0}', space=smem, size = 0x400, scoped, tag = 'prefetched SMEM operand 0']
  %s0 = inlined_call_operand.hbm [shape: s32[2,16], index: 0, kind: input, shape index: {}]
  %s1 = inlined_call_operand.vmem [shape: bf16[2,16,128], index: 1, kind: input, shape index: {}]
  %s2 = inlined_call_operand.hbm [shape: bf16[2,16,128], index: 2, kind: input, shape index: {}]
  %s3 = inlined_call_operand.hbm [shape: bf16[2,16,16], index: 3, kind: input, shape index: {}]
  %s4 = inlined_call_operand.vmem [shape: bf16[2,8,16], index: 4, kind: input, shape index: {}]
  %s5 = inlined_call_operand.vmem [shape: f32[2,8,1], index: 5, kind: input, shape index: {}]
  %s6 = inlined_call_operand.hbm [shape: bf16[128,128], index: 6, kind: input, shape index: {}]
  %s7 = inlined_call_operand.hbm [shape: bf16[128,128], index: 7, kind: input, shape index: {}]
  %s8 = inlined_call_operand.hbm [shape: bf16[128,128], index: 8, kind: input, shape index: {}]
  %s9 = inlined_call_operand.hbm [shape: bf16[128,128], index: 9, kind: input, shape index: {}]
  %s10 = inlined_call_operand.vmem [shape: f32[1,128], index: 10, kind: input, shape index: {}]
  %s11 = inlined_call_operand.hbm [shape: f32[2,8,128], index: 11, kind: output, shape index: {}]
  %s12 = sld [smem:[#allocation0]]
  $region97: #{tpu_custom_call.1} parent=0
    _
  %s14 = ssub.s32 1, %s12
  %s15 = scalar_select 0, %s14, %s12
  %17 = dma.hbm_to_smem %s0, 32, [#allocation5], [#allocation4]
  %18 = dma.done [#allocation4], 32
  %19 = sfence
  $region1: #{tpu_custom_call.1} parent=0
    #allocation6 [shape = 'u8[8192]{0}', space=vmem, size = 0x2000, scoped, tag = 'input window, operand 2']
    #allocation7 [shape = 's32[2]{0}', space=sflag, size = 0x8, scoped, tag = 'scoped memory for tpu_custom_call.1']
    #allocation8 [shape = 's32[2]{0}', space=sflag, size = 0x8, scoped, tag = 'scoped memory for tpu_custom_call.1']
    #allocation9 [shape = 'u8[8192]{0}', space=vmem, size = 0x2000, scoped, tag = 'input window, operand 3']
    #allocation10 [shape = 's32[2]{0}', space=sflag, size = 0x8, scoped, tag = 'scoped memory for tpu_custom_call.1']
    #allocation11 [shape = 'u8[32768]{0}', space=vmem, size = 0x8000, scoped, tag = 'input window, operand 6, single buffered']
    #allocation12 [shape = 'u8[32768]{0}', space=vmem, size = 0x8000, scoped, tag = 'input window, operand 7, single buffered']
    #allocation13 [shape = 's32[1]{0}', space=sflag, size = 0x4, scoped, tag = 'scoped memory for tpu_custom_call.1']
    #allocation14 [shape = 'u8[32768]{0}', space=vmem, size = 0x8000, scoped, tag = 'input window, operand 8, single buffered']
    #allocation15 [shape = 'u8[32768]{0}', space=vmem, size = 0x8000, scoped, tag = 'input window, operand 9, single buffered']
    #allocation16 [shape = 's32[1]{0}', space=sflag, size = 0x4, scoped, tag = 'scoped memory for tpu_custom_call.1']
    #allocation17 [shape = 'u8[8192]{0}', space=vmem, size = 0x2000, scoped, tag = 'output window, operand 0']
    %20 = vsyncpa [#allocation7], 0
    %s21 = scalar_lea.sflag [#allocation7], 1
    %22 = vsyncpa %s21, 0
    %23 = vsyncpa [#allocation10], 0
    %s24 = scalar_lea.sflag [#allocation10], 1
    %25 = vsyncpa %s24, 0
    %26 = vsyncpa [#allocation13], 0
    %27 = vsyncpa [#allocation16], 0
    %28 = vsyncpa [#allocation8], 0
    %s29 = scalar_lea.sflag [#allocation8], 1
    %30 = vsyncpa %s29, 0
    loop: start=0, step=1, limit=4
    $region2: #{tpu_custom_call.1} parent=1 // loop_pre_header
      _
    $region3: #{tpu_custom_call.1} parent=1 // loop_header
      %s32 = sphi 0, %s36
      %p33 = scmp.ge.s32.totalorder %s32, 4
      %s42 = sphi 0, %s44
      %s45 = sphi 0, %s42
      %s46 = sphi 0, %s45
      %s62 = sphi 0, %s46
      %s68 = sphi 0, %s70
      %s71 = sphi 0, %s68
      %s72 = sphi 0, %s71
      %s88 = sphi 0, %s72
      %s94 = sphi 0, %s96
      %s97 = sphi 0, %s94
      %s98 = sphi 0, %s97
      %s114 = sphi 0, %s98
      %s120 = sphi 0, %s122
      %s123 = sphi 0, %s120
      %s124 = sphi 0, %s123
      %s140 = sphi 0, %s124
      %s146 = sphi 0, %s148
      %s149 = sphi 0, %s146
      %s150 = sphi 0, %s149
      %s166 = sphi 0, %s150
      %s170 = sphi 0, %s170
      %s172 = sphi 0, %s170
      %s173 = sphi 0, %s172
      %s187 = sphi 0, %s173
      %s191 = sphi 0, %s191
      %s193 = sphi 0, %s191
      %s194 = sphi 0, %s193
      %s208 = sphi 0, %s194
      %s212 = sphi 0, %s212
      %s214 = sphi 0, %s212
      %s215 = sphi 0, %s214
      %s229 = sphi 0, %s215
      %s233 = sphi 0, %s233
      %s235 = sphi 0, %s233
      %s236 = sphi 0, %s235
      %s250 = sphi 0, %s236
      %s254 = sphi 0, %s254
      %s256 = sphi 0, %s254
      %s257 = sphi 0, %s256
      %s271 = sphi 0, %s257
      %s277 = sphi 0, %s279
      %s280 = sphi 0, %s277
      %s281 = sphi 0, %s280
      %s297 = sphi 0, %s281
    $region4: #{tpu_custom_call.1} parent=1 // loop_header_branch
      %35 = sbr.rel (%p33) target = $region8
    $region5: #{tpu_custom_call.1} parent=1 // loop_body
      %s37 = ssub.s32 %s32, 1
      %s38 = ssub.s32 %s32, 2
      %s39 = sadd.s32 %s32, 1
      %s40 = ssub.s32 %s32, %s39
      %p41 = scmp.eq.s32.totalorder %s40, 0
      %s43 = sadd.s32 %s42, 1
      %s44 = scalar_select %p41, %s42, %s43
      %p47 = pneg %p41
      %p48 = scmp.eq.s32.totalorder %s32, 1
      %p49 = por %p47, %p48
      %p50 = scmp.ne.s32.totalorder %s42, %s45
      %p51 = scmp.eq.s32.totalorder %s32, 0
      %p52 = por %p50, %p51
      %p53 = scmp.ne.s32.totalorder %s42, %s45
      %p54 = scmp.eq.s32.totalorder %s37, 1
      %p55 = por %p53, %p54
      %p56 = scmp.ne.s32.totalorder %s45, %s46
      %p57 = scmp.eq.s32.totalorder %s37, 0
      %p58 = por %p56, %p57
      %p59 = scmp.ne.s32.totalorder %s45, %s46
      %p60 = scmp.eq.s32.totalorder %s38, 1
      %p61 = por %p59, %p60
      %p63 = scmp.ne.s32.totalorder %s46, %s62
      %p64 = scmp.eq.s32.totalorder %s38, 0
      %p65 = por %p63, %p64
      %s66 = ssub.s32 %s32, %s39
      %p67 = scmp.eq.s32.totalorder %s66, 0
      %s69 = sadd.s32 %s68, 1
      %s70 = scalar_select %p67, %s68, %s69
      %p73 = pneg %p67
      %p74 = scmp.eq.s32.totalorder %s32, 1
      %p75 = por %p73, %p74
      %p76 = scmp.ne.s32.totalorder %s68, %s71
      %p77 = scmp.eq.s32.totalorder %s32, 0
      %p78 = por %p76, %p77
      %p79 = scmp.ne.s32.totalorder %s68, %s71
      %p80 = scmp.eq.s32.totalorder %s37, 1
      %p81 = por %p79, %p80
      %p82 = scmp.ne.s32.totalorder %s71, %s72
      %p83 = scmp.eq.s32.totalorder %s37, 0
      %p84 = por %p82, %p83
      %p85 = scmp.ne.s32.totalorder %s71, %s72
      %p86 = scmp.eq.s32.totalorder %s38, 1
      %p87 = por %p85, %p86
      %p89 = scmp.ne.s32.totalorder %s72, %s88
      %p90 = scmp.eq.s32.totalorder %s38, 0
      %p91 = por %p89, %p90
      %s92 = ssub.s32 %s32, %s39
      %p93 = scmp.eq.s32.totalorder %s92, 0
      %s95 = sadd.s32 %s94, 1
      %s96 = scalar_select %p93, %s94, %s95
      %p99 = pneg %p93
      %p100 = scmp.eq.s32.totalorder %s32, 1
      %p101 = por %p99, %p100
      %p102 = scmp.ne.s32.totalorder %s94, %s97
      %p103 = scmp.eq.s32.totalorder %s32, 0
      %p104 = por %p102, %p103
      %p105 = scmp.ne.s32.totalorder %s94, %s97
      %p106 = scmp.eq.s32.totalorder %s37, 1
      %p107 = por %p105, %p106
      %p108 = scmp.ne.s32.totalorder %s97, %s98
      %p109 = scmp.eq.s32.totalorder %s37, 0
      %p110 = por %p108, %p109
      %p111 = scmp.ne.s32.totalorder %s97, %s98
      %p112 = scmp.eq.s32.totalorder %s38, 1
      %p113 = por %p111, %p112
      %p115 = scmp.ne.s32.totalorder %s98, %s114
      %p116 = scmp.eq.s32.totalorder %s38, 0
      %p117 = por %p115, %p116
      %s118 = ssub.s32 %s32, %s39
      %p119 = scmp.eq.s32.totalorder %s118, 0
      %s121 = sadd.s32 %s120, 1
      %s122 = scalar_select %p119, %s120, %s121
      %p125 = pneg %p119
      %p126 = scmp.eq.s32.totalorder %s32, 1
      %p127 = por %p125, %p126
      %p128 = scmp.ne.s32.totalorder %s120, %s123
      %p129 = scmp.eq.s32.totalorder %s32, 0
      %p130 = por %p128, %p129
      %p131 = scmp.ne.s32.totalorder %s120, %s123
      %p132 = scmp.eq.s32.totalorder %s37, 1
      %p133 = por %p131, %p132
      %p134 = scmp.ne.s32.totalorder %s123, %s124
      %p135 = scmp.eq.s32.totalorder %s37, 0
      %p136 = por %p134, %p135
      %p137 = scmp.ne.s32.totalorder %s123, %s124
      %p138 = scmp.eq.s32.totalorder %s38, 1
      %p139 = por %p137, %p138
      %p141 = scmp.ne.s32.totalorder %s124, %s140
      %p142 = scmp.eq.s32.totalorder %s38, 0
      %p143 = por %p141, %p142
      %s144 = ssub.s32 %s32, %s39
      %p145 = scmp.eq.s32.totalorder %s144, 0
      %s147 = sadd.s32 %s146, 1
      %s148 = scalar_select %p145, %s146, %s147
      %p151 = pneg %p145
      %p152 = scmp.eq.s32.totalorder %s32, 1
      %p153 = por %p151, %p152
      %p154 = scmp.ne.s32.totalorder %s146, %s149
      %p155 = scmp.eq.s32.totalorder %s32, 0
      %p156 = por %p154, %p155
      %p157 = scmp.ne.s32.totalorder %s146, %s149
      %p158 = scmp.eq.s32.totalorder %s37, 1
      %p159 = por %p157, %p158
      %p160 = scmp.ne.s32.totalorder %s149, %s150
      %p161 = scmp.eq.s32.totalorder %s37, 0
      %p162 = por %p160, %p161
      %p163 = scmp.ne.s32.totalorder %s149, %s150
      %p164 = scmp.eq.s32.totalorder %s38, 1
      %p165 = por %p163, %p164
      %p167 = scmp.ne.s32.totalorder %s150, %s166
      %p168 = scmp.eq.s32.totalorder %s38, 0
      %p169 = por %p167, %p168
      %s171 = sadd.s32 %s170, 1
      %p174 = scmp.eq.s32.totalorder %s32, 1
      %p175 = scmp.ne.s32.totalorder %s170, %s172
      %p176 = scmp.eq.s32.totalorder %s32, 0
      %p177 = por %p175, %p176
      %p178 = scmp.ne.s32.totalorder %s170, %s172
      %p179 = scmp.eq.s32.totalorder %s37, 1
      %p180 = por %p178, %p179
      %p181 = scmp.ne.s32.totalorder %s172, %s173
      %p182 = scmp.eq.s32.totalorder %s37, 0
      %p183 = por %p181, %p182
      %p184 = scmp.ne.s32.totalorder %s172, %s173
      %p185 = scmp.eq.s32.totalorder %s38, 1
      %p186 = por %p184, %p185
      %p188 = scmp.ne.s32.totalorder %s173, %s187
      %p189 = scmp.eq.s32.totalorder %s38, 0
      %p190 = por %p188, %p189
      %s192 = sadd.s32 %s191, 1
      %p195 = scmp.eq.s32.totalorder %s32, 1
      %p196 = scmp.ne.s32.totalorder %s191, %s193
      %p197 = scmp.eq.s32.totalorder %s32, 0
      %p198 = por %p196, %p197
      %p199 = scmp.ne.s32.totalorder %s191, %s193
      %p200 = scmp.eq.s32.totalorder %s37, 1
      %p201 = por %p199, %p200
      %p202 = scmp.ne.s32.totalorder %s193, %s194
      %p203 = scmp.eq.s32.totalorder %s37, 0
      %p204 = por %p202, %p203
      %p205 = scmp.ne.s32.totalorder %s193, %s194
      %p206 = scmp.eq.s32.totalorder %s38, 1
      %p207 = por %p205, %p206
      %p209 = scmp.ne.s32.totalorder %s194, %s208
      %p210 = scmp.eq.s32.totalorder %s38, 0
      %p211 = por %p209, %p210
      %s213 = sadd.s32 %s212, 1
      %p216 = scmp.eq.s32.totalorder %s32, 1
      %p217 = scmp.ne.s32.totalorder %s212, %s214
      %p218 = scmp.eq.s32.totalorder %s32, 0
      %p219 = por %p217, %p218
      %p220 = scmp.ne.s32.totalorder %s212, %s214
      %p221 = scmp.eq.s32.totalorder %s37, 1
      %p222 = por %p220, %p221
      %p223 = scmp.ne.s32.totalorder %s214, %s215
      %p224 = scmp.eq.s32.totalorder %s37, 0
      %p225 = por %p223, %p224
      %p226 = scmp.ne.s32.totalorder %s214, %s215
      %p227 = scmp.eq.s32.totalorder %s38, 1
      %p228 = por %p226, %p227
      %p230 = scmp.ne.s32.totalorder %s215, %s229
      %p231 = scmp.eq.s32.totalorder %s38, 0
      %p232 = por %p230, %p231
      %s234 = sadd.s32 %s233, 1
      %p237 = scmp.eq.s32.totalorder %s32, 1
      %p238 = scmp.ne.s32.totalorder %s233, %s235
      %p239 = scmp.eq.s32.totalorder %s32, 0
      %p240 = por %p238, %p239
      %p241 = scmp.ne.s32.totalorder %s233, %s235
      %p242 = scmp.eq.s32.totalorder %s37, 1
      %p243 = por %p241, %p242
      %p244 = scmp.ne.s32.totalorder %s235, %s236
      %p245 = scmp.eq.s32.totalorder %s37, 0
      %p246 = por %p244, %p245
      %p247 = scmp.ne.s32.totalorder %s235, %s236
      %p248 = scmp.eq.s32.totalorder %s38, 1
      %p249 = por %p247, %p248
      %p251 = scmp.ne.s32.totalorder %s236, %s250
      %p252 = scmp.eq.s32.totalorder %s38, 0
      %p253 = por %p251, %p252
      %s255 = sadd.s32 %s254, 1
      %p258 = scmp.eq.s32.totalorder %s32, 1
      %p259 = scmp.ne.s32.totalorder %s254, %s256
      %p260 = scmp.eq.s32.totalorder %s32, 0
      %p261 = por %p259, %p260
      %p262 = scmp.ne.s32.totalorder %s254, %s256
      %p263 = scmp.eq.s32.totalorder %s37, 1
      %p264 = por %p262, %p263
      %p265 = scmp.ne.s32.totalorder %s256, %s257
      %p266 = scmp.eq.s32.totalorder %s37, 0
      %p267 = por %p265, %p266
      %p268 = scmp.ne.s32.totalorder %s256, %s257
      %p269 = scmp.eq.s32.totalorder %s38, 1
      %p270 = por %p268, %p269
      %p272 = scmp.ne.s32.totalorder %s257, %s271
      %p273 = scmp.eq.s32.totalorder %s38, 0
      %p274 = por %p272, %p273
      %s275 = ssub.s32 %s32, %s39
      %p276 = scmp.eq.s32.totalorder %s275, 0
      %s278 = sadd.s32 %s277, 1
      %s279 = scalar_select %p276, %s277, %s278
      %p282 = pneg %p276
      %p283 = scmp.eq.s32.totalorder %s32, 1
      %p284 = por %p282, %p283
      %p285 = scmp.ne.s32.totalorder %s277, %s280
      %p286 = scmp.eq.s32.totalorder %s32, 0
      %p287 = por %p285, %p286
      %p288 = scmp.ne.s32.totalorder %s277, %s280
      %p289 = scmp.eq.s32.totalorder %s37, 1
      %p290 = por %p288, %p289
      %p291 = scmp.ne.s32.totalorder %s280, %s281
      %p292 = scmp.eq.s32.totalorder %s37, 0
      %p293 = por %p291, %p292
      %p294 = scmp.ne.s32.totalorder %s280, %s281
      %p295 = scmp.eq.s32.totalorder %s38, 1
      %p296 = por %p294, %p295
      %p298 = scmp.ne.s32.totalorder %s281, %s297
      %p299 = scmp.eq.s32.totalorder %s38, 0
      %p300 = por %p298, %p299
      %p301 = scmp.le.s32.totalorder 1, %s32
      %p302 = scmp.lt.s32.totalorder %s32, 3
      %p303 = pnand %p301, %p302
      %p304 = pneg %p303
      // Predicated region
      $region9: #{tpu_custom_call.1} parent=5 // pred_check
        _
      $region10: #{tpu_custom_call.1} parent=5 // pred_check_branch
        %306 = sbr.rel (%p303) target = $region12
      $region11: #{tpu_custom_call.1} parent=5 // pred_region
        %s307 = ssub.s32 %s32, 1
        // Predicated region
        $region13: #{tpu_custom_call.1} parent=11 // pred_check
          %p308 = pneg %p183
        $region14: #{tpu_custom_call.1} parent=11 // pred_check_branch
          %310 = sbr.rel (%p308) target = $region16
        $region15: #{tpu_custom_call.1} parent=11 // pred_region
          %s312 = ssub.s32 1024, 1024
          %313 = vsyncadd [#allocation10], %s312
          %s314 = sshll.u32 [#allocation11], 4
          %s315 = int_to_ptr.vmem [resolvable:$true] %s314
          %320 = dma.hbm_to_vmem [thread:$0]  %s6, 1024, %s315, [#allocation10], 64, 64, 4
        $region16: #{tpu_custom_call.1} parent=11 // pred_fallthru
          _
        // Predicated region
        $region17: #{tpu_custom_call.1} parent=11 // pred_check
          %p321 = pneg %p204
        $region18: #{tpu_custom_call.1} parent=11 // pred_check_branch
          %323 = sbr.rel (%p321) target = $region20
        $region19: #{tpu_custom_call.1} parent=11 // pred_region
          %s325 = ssub.s32 1024, 1024
          %326 = vsyncadd [#allocation13], %s325
          %s327 = sshll.u32 [#allocation12], 4
          %s328 = int_to_ptr.vmem [resolvable:$true] %s327
          %333 = dma.hbm_to_vmem [thread:$0]  %s7, 1024, %s328, [#allocation13], 64, 64, 4
        $region20: #{tpu_custom_call.1} parent=11 // pred_fallthru
          _
        // Predicated region
        $region21: #{tpu_custom_call.1} parent=11 // pred_check
          %p334 = pneg %p225
        $region22: #{tpu_custom_call.1} parent=11 // pred_check_branch
          %336 = sbr.rel (%p334) target = $region24
        $region23: #{tpu_custom_call.1} parent=11 // pred_region
          %s338 = ssub.s32 1024, 1024
          %339 = vsyncadd [#allocation13], %s338
          %s340 = sshll.u32 [#allocation14], 4
          %s341 = int_to_ptr.vmem [resolvable:$true] %s340
          %346 = dma.hbm_to_vmem [thread:$0]  %s8, 1024, %s341, [#allocation13], 64, 64, 4
        $region24: #{tpu_custom_call.1} parent=11 // pred_fallthru
          _
        // Predicated region
        $region25: #{tpu_custom_call.1} parent=11 // pred_check
          %p347 = pneg %p246
        $region26: #{tpu_custom_call.1} parent=11 // pred_check_branch
          %349 = sbr.rel (%p347) target = $region28
        $region27: #{tpu_custom_call.1} parent=11 // pred_region
          %s351 = ssub.s32 1024, 1024
          %352 = vsyncadd [#allocation16], %s351
          %s353 = sshll.u32 [#allocation15], 4
          %s354 = int_to_ptr.vmem [resolvable:$true] %s353
          %359 = dma.hbm_to_vmem [thread:$0]  %s9, 1024, %s354, [#allocation16], 64, 64, 4
        $region28: #{tpu_custom_call.1} parent=11 // pred_fallthru
          _
        // Predicated region
        $region29: #{tpu_custom_call.1} parent=11 // pred_check
          %p360 = pneg %p267
        $region30: #{tpu_custom_call.1} parent=11 // pred_check_branch
          %362 = sbr.rel (%p360) target = $region32
        $region31: #{tpu_custom_call.1} parent=11 // pred_region
          _
        $region32: #{tpu_custom_call.1} parent=11 // pred_fallthru
          _
      $region12: #{tpu_custom_call.1} parent=5 // pred_fallthru
        _
      %p363 = scmp.lt.s32.totalorder %s32, 2
      // Predicated region
      $region33: #{tpu_custom_call.1} parent=5 // pred_check
        %p364 = pneg %p363
      $region34: #{tpu_custom_call.1} parent=5 // pred_check_branch
        %366 = sbr.rel (%p364) target = $region36
      $region35: #{tpu_custom_call.1} parent=5 // pred_region
        // Predicated region
        $region37: #{tpu_custom_call.1} parent=35 // pred_check
          %p367 = pneg %p52
        $region38: #{tpu_custom_call.1} parent=35 // pred_check_branch
          %369 = sbr.rel (%p367) target = $region40
        $region39: #{tpu_custom_call.1} parent=35 // pred_region
          %p370 = scmp.lt.s32.totalorder %s32, 1
          %s371 = scalar_select %p370, %s32, 1
          %s372 = smul.addr %s371, 2
          %s373 = smul.addr %s372, 4
          %s374 = scalar_lea.vmem %s1, %s373
        $region40: #{tpu_custom_call.1} parent=35 // pred_fallthru
          _
        // Predicated region
        $region41: #{tpu_custom_call.1} parent=35 // pred_check
          %p375 = pneg %p78
        $region42: #{tpu_custom_call.1} parent=35 // pred_check_branch
          %377 = sbr.rel (%p375) target = $region44
        $region43: #{tpu_custom_call.1} parent=35 // pred_region
          %s378 = sand.u32 %s68, 1
          %s379 = scalar_lea.sflag [#allocation7], %s378
          %s380 = sand.u32 %s68, 1
          %s381 = smul.addr %s380, 8
          %s382 = scalar_lea.vmem [#allocation6], %s381
          %s384 = ssub.s32 128, 128
          %385 = vsyncadd %s379, %s384
          %s386 = smul.addr %s32, 2
          %s387 = smul.addr %s386, 64
          %s388 = scalar_lea.hbm %s2, %s387
          %s389 = sshll.u32 %s382, 4
          %s390 = int_to_ptr.vmem [resolvable:$true] %s389
          %395 = dma.hbm_to_vmem [thread:$0]  %s388, 128, %s390, %s379, 64, 64, 4
        $region44: #{tpu_custom_call.1} parent=35 // pred_fallthru
          _
        // Predicated region
        $region45: #{tpu_custom_call.1} parent=35 // pred_check
          %p396 = pneg %p104
        $region46: #{tpu_custom_call.1} parent=35 // pred_check_branch
          %398 = sbr.rel (%p396) target = $region48
        $region47: #{tpu_custom_call.1} parent=35 // pred_region
          %s399 = sand.u32 %s32, 1
          %s400 = scalar_lea.sflag [#allocation10], %s399
          %s401 = sand.u32 %s94, 1
          %s402 = smul.addr %s401, 8
          %s403 = scalar_lea.vmem [#allocation9], %s402
          %s405 = ssub.s32 128, 128
          %406 = vsyncadd %s400, %s405
          %s407 = smul.addr %s32, 2
          %s408 = smul.addr %s407, 64
          %s409 = scalar_lea.hbm %s3, %s408
          %s410 = sshll.u32 %s403, 4
          %s411 = int_to_ptr.vmem [resolvable:$true] %s410
          %416 = dma.hbm_to_vmem [thread:$0]  %s409, 128, %s411, %s400, 64, 64, 4
        $region48: #{tpu_custom_call.1} parent=35 // pred_fallthru
          _
        // Predicated region
        $region49: #{tpu_custom_call.1} parent=35 // pred_check
          %p417 = pneg %p130
        $region50: #{tpu_custom_call.1} parent=35 // pred_check_branch
          %419 = sbr.rel (%p417) target = $region52
        $region51: #{tpu_custom_call.1} parent=35 // pred_region
          %p420 = scmp.lt.s32.totalorder %s32, 1
          %s421 = scalar_select %p420, %s32, 1
          %s422 = smul.addr %s421, 4
          %s423 = scalar_lea.vmem %s4, %s422
        $region52: #{tpu_custom_call.1} parent=35 // pred_fallthru
          _
        // Predicated region
        $region53: #{tpu_custom_call.1} parent=35 // pred_check
          %p424 = pneg %p156
        $region54: #{tpu_custom_call.1} parent=35 // pred_check_branch
          %426 = sbr.rel (%p424) target = $region56
        $region55: #{tpu_custom_call.1} parent=35 // pred_region
          %p427 = scmp.lt.s32.totalorder %s32, 1
          %s428 = scalar_select %p427, %s32, 1
          %s429 = smul.addr %s428, 8
          %s430 = scalar_lea.vmem %s5, %s429
        $region56: #{tpu_custom_call.1} parent=35 // pred_fallthru
          _
      $region36: #{tpu_custom_call.1} parent=5 // pred_fallthru
        _
      %p431 = scmp.le.s32.totalorder 1, %s32
      %p432 = scmp.lt.s32.totalorder %s32, 3
      %p433 = pnand %p431, %p432
      %p434 = pneg %p433
      // Predicated region
      $region57: #{tpu_custom_call.1} parent=5 // pred_check
        _
      $region58: #{tpu_custom_call.1} parent=5 // pred_check_branch
        %436 = sbr.rel (%p433) target = $region60
      $region59: #{tpu_custom_call.1} parent=5 // pred_region
        %s437 = ssub.s32 %s32, 1
        %s438 = sand.u32 %s71, 1
        %s439 = scalar_lea.sflag [#allocation7], %s438
        %s440 = sand.u32 %s71, 1
        %s441 = smul.addr %s440, 8
        %s442 = scalar_lea.vmem [#allocation6], %s441
        // Predicated region
        $region61: #{tpu_custom_call.1} parent=59 // pred_check
          %p443 = pneg %p84
        $region62: #{tpu_custom_call.1} parent=59 // pred_check_branch
          %445 = sbr.rel (%p443) target = $region64
        $region63: #{tpu_custom_call.1} parent=59 // pred_region
          %446 = dma.done %s439, 128
        $region64: #{tpu_custom_call.1} parent=59 // pred_fallthru
          _
        %s447 = sand.u32 %s37, 1
        %s448 = scalar_lea.sflag [#allocation10], %s447
        %s449 = sand.u32 %s97, 1
        %s450 = smul.addr %s449, 8
        %s451 = scalar_lea.vmem [#allocation9], %s450
        // Predicated region
        $region65: #{tpu_custom_call.1} parent=59 // pred_check
          %p452 = pneg %p110
        $region66: #{tpu_custom_call.1} parent=59 // pred_check_branch
          %454 = sbr.rel (%p452) target = $region68
        $region67: #{tpu_custom_call.1} parent=59 // pred_region
          %455 = dma.done %s448, 128
        $region68: #{tpu_custom_call.1} parent=59 // pred_fallthru
          _
        // Predicated region
        $region69: #{tpu_custom_call.1} parent=59 // pred_check
          %p456 = pneg %p183
        $region70: #{tpu_custom_call.1} parent=59 // pred_check_branch
          %458 = sbr.rel (%p456) target = $region72
        $region71: #{tpu_custom_call.1} parent=59 // pred_region
          %459 = dma.done [#allocation10], 1024
        $region72: #{tpu_custom_call.1} parent=59 // pred_fallthru
          _
        // Predicated region
        $region73: #{tpu_custom_call.1} parent=59 // pred_check
          %p460 = pneg %p204
        $region74: #{tpu_custom_call.1} parent=59 // pred_check_branch
          %462 = sbr.rel (%p460) target = $region76
        $region75: #{tpu_custom_call.1} parent=59 // pred_region
          %463 = dma.done [#allocation13], 1024
        $region76: #{tpu_custom_call.1} parent=59 // pred_fallthru
          _
        // Predicated region
        $region77: #{tpu_custom_call.1} parent=59 // pred_check
          %p464 = pneg %p225
        $region78: #{tpu_custom_call.1} parent=59 // pred_check_branch
          %466 = sbr.rel (%p464) target = $region80
        $region79: #{tpu_custom_call.1} parent=59 // pred_region
          %467 = dma.done [#allocation13], 1024
        $region80: #{tpu_custom_call.1} parent=59 // pred_fallthru
          _
        // Predicated region
        $region81: #{tpu_custom_call.1} parent=59 // pred_check
          %p468 = pneg %p246
        $region82: #{tpu_custom_call.1} parent=59 // pred_check_branch
          %470 = sbr.rel (%p468) target = $region84
        $region83: #{tpu_custom_call.1} parent=59 // pred_region
          %471 = dma.done [#allocation16], 1024
        $region84: #{tpu_custom_call.1} parent=59 // pred_fallthru
          _
        %p472 = scmp.lt.s32.totalorder %s37, 1
        %s473 = scalar_select %p472, %s37, 1
        %s474 = smul.addr %s473, 2
        %s475 = smul.addr %s474, 4
        %s476 = scalar_lea.vmem %s1, %s475
        %p477 = pneg %p58
        %p478 = pneg %p55
        %s479 = sand.u32 %s71, 1
        %s480 = scalar_lea.sflag [#allocation7], %s479
        %s481 = sand.u32 %s71, 1
        %s482 = smul.addr %s481, 8
        %s483 = scalar_lea.vmem [#allocation6], %s482
        %p484 = pneg %p84
        %p485 = pneg %p81
        %s486 = sand.u32 %s37, 1
        %s487 = scalar_lea.sflag [#allocation10], %s486
        %s488 = sand.u32 %s97, 1
        %s489 = smul.addr %s488, 8
        %s490 = scalar_lea.vmem [#allocation9], %s489
        %p491 = pneg %p110
        %p492 = pneg %p107
        %p493 = scmp.lt.s32.totalorder %s37, 1
        %s494 = scalar_select %p493, %s37, 1
        %s495 = smul.addr %s494, 4
        %s496 = scalar_lea.vmem %s4, %s495
        %p497 = pneg %p136
        %p498 = pneg %p133
        %p499 = scmp.lt.s32.totalorder %s37, 1
        %s500 = scalar_select %p499, %s37, 1
        %s501 = smul.addr %s500, 8
        %s502 = scalar_lea.vmem %s5, %s501
        %p503 = pneg %p162
        %p504 = pneg %p159
        %p505 = pneg %p183
        %p506 = pneg %p180
        %p507 = pneg %p204
        %p508 = pneg %p201
        %p509 = pneg %p225
        %p510 = pneg %p222
        %p511 = pneg %p246
        %p512 = pneg %p243
        %p513 = pneg %p267
        %p514 = pneg %p264
        %p515 = pneg %p293
        %p516 = pneg %p290
        %s517 = sand.u32 %s280, 1
        %s518 = scalar_lea.sflag [#allocation8], %s517
        %s519 = sand.u32 %s280, 1
        %s520 = smul.addr %s519, 8
        %s521 = scalar_lea.vmem [#allocation17], %s520
        %p522 = scmp.lt.s32.totalorder %s37, 1
        %s523 = scalar_select %p522, %s37, 1
        %s524 = smul.addr %s523, 2
        %s525 = smul.addr %s524, 4
        %s526 = scalar_lea.vmem %s1, %s525
        %p527 = scmp.lt.s32.totalorder %s37, 1
        %s528 = scalar_select %p527, %s37, 1
        %s529 = smul.addr %s528, 4
        %s530 = scalar_lea.vmem %s4, %s529
        %p531 = scmp.lt.s32.totalorder %s37, 1
        %s532 = scalar_select %p531, %s37, 1
        %s533 = smul.addr %s532, 8
        %s534 = scalar_lea.vmem %s5, %s533
        %v536 = vld [vmem:[%s526] sm:$0xf]
        %v537 = vld [vmem:[%s526 + $0x4] sm:$0xf]
        %v538 = vld [vmem:[%s442] sm:$0xf]
        %v539 = vld [vmem:[%s442 + $0x4] sm:$0xf]
        %v540 = vld [vmem:[%s451] sm:$0xf]
        %v541 = vld [vmem:[%s451 + $0x4] sm:$0xf]
        %v542 = vld [vmem:[#allocation11] sm:$0xf]
        %v543 = vld [vmem:[#allocation11 + $0x4] sm:$0xf]
        %v544 = vld [vmem:[#allocation11 + $0x8] sm:$0xf]
        %v545 = vld [vmem:[#allocation11 + $0xc] sm:$0xf]
        %v546 = vld [vmem:[#allocation11 + $0x10] sm:$0xf]
        %v547 = vld [vmem:[#allocation11 + $0x14] sm:$0xf]
        %v548 = vld [vmem:[#allocation11 + $0x18] sm:$0xf]
        %v549 = vld [vmem:[#allocation11 + $0x1c] sm:$0xf]
        %v550 = vld [vmem:[#allocation11 + $0x20] sm:$0xf]
        %v551 = vld [vmem:[#allocation11 + $0x24] sm:$0xf]
        %v552 = vld [vmem:[#allocation11 + $0x28] sm:$0xf]
        %v553 = vld [vmem:[#allocation11 + $0x2c] sm:$0xf]
        %v554 = vld [vmem:[#allocation11 + $0x30] sm:$0xf]
        %v555 = vld [vmem:[#allocation11 + $0x34] sm:$0xf]
        %v556 = vld [vmem:[#allocation11 + $0x38] sm:$0xf]
        %v557 = vld [vmem:[#allocation11 + $0x3c] sm:$0xf]
        %v558 = vld [vmem:[#allocation12] sm:$0xf]
        %v559 = vld [vmem:[#allocation12 + $0x4] sm:$0xf]
        %v560 = vld [vmem:[#allocation12 + $0x8] sm:$0xf]
        %v561 = vld [vmem:[#allocation12 + $0xc] sm:$0xf]
        %v562 = vld [vmem:[#allocation12 + $0x10] sm:$0xf]
        %v563 = vld [vmem:[#allocation12 + $0x14] sm:$0xf]
        %v564 = vld [vmem:[#allocation12 + $0x18] sm:$0xf]
        %v565 = vld [vmem:[#allocation12 + $0x1c] sm:$0xf]
        %v566 = vld [vmem:[#allocation12 + $0x20] sm:$0xf]
        %v567 = vld [vmem:[#allocation12 + $0x24] sm:$0xf]
        %v568 = vld [vmem:[#allocation12 + $0x28] sm:$0xf]
        %v569 = vld [vmem:[#allocation12 + $0x2c] sm:$0xf]
        %v570 = vld [vmem:[#allocation12 + $0x30] sm:$0xf]
        %v571 = vld [vmem:[#allocation12 + $0x34] sm:$0xf]
        %v572 = vld [vmem:[#allocation12 + $0x38] sm:$0xf]
        %v573 = vld [vmem:[#allocation12 + $0x3c] sm:$0xf]
        %v576 = vunpack.c.l.b16 %v538
        %v577 = vunpack.c.l.b16 %v539
        %v578 = vpack.c.b16 %v577, %v576
        %v596 = vunpack.c.l.b16 %v542
        %v597 = vunpack.c.l.b16 %v543
        %v598 = vunpack.c.l.b16 %v544
        %v599 = vunpack.c.l.b16 %v545
        %v600 = vunpack.c.l.b16 %v546
        %v601 = vunpack.c.l.b16 %v547
        %v602 = vunpack.c.l.b16 %v548
        %v603 = vunpack.c.l.b16 %v549
        %v604 = vunpack.c.l.b16 %v550
        %v605 = vunpack.c.l.b16 %v551
        %v606 = vunpack.c.l.b16 %v552
        %v607 = vunpack.c.l.b16 %v553
        %v608 = vunpack.c.l.b16 %v554
        %v609 = vunpack.c.l.b16 %v555
        %v610 = vunpack.c.l.b16 %v556
        %v611 = vunpack.c.l.b16 %v557
        %v612 = vpack.c.b16 %v597, %v596
        %v613 = vpack.c.b16 %v599, %v598
        %v614 = vpack.c.b16 %v601, %v600
        %v615 = vpack.c.b16 %v603, %v602
        %v616 = vpack.c.b16 %v605, %v604
        %v617 = vpack.c.b16 %v607, %v606
        %v618 = vpack.c.b16 %v609, %v608
        %v619 = vpack.c.b16 %v611, %v610
        %628 = vmatprep.subr.bf16.mxu0 0
        %629 = vmatpush1.bf16.msra.mxu0 %v612
        %630 = vmatprep.subr.bf16.mxu0 0
        %631 = vmatpush1.bf16.msra.mxu0 %v613
        %632 = vmatprep.subr.bf16.mxu0 0
        %633 = vmatpush1.bf16.msra.mxu0 %v614
        %634 = vmatprep.subr.bf16.mxu0 0
        %635 = vmatpush1.bf16.msra.mxu0 %v615
        %636 = vmatprep.subr.bf16.mxu0 0
        %637 = vmatpush1.bf16.msra.mxu0 %v616
        %638 = vmatprep.subr.bf16.mxu0 0
        %639 = vmatpush1.bf16.msra.mxu0 %v617
        %640 = vmatprep.subr.bf16.mxu0 0
        %641 = vmatpush1.bf16.msra.mxu0 %v618
        %642 = vmatprep.subr.bf16.mxu0 0
        %643 = vmatpush1.bf16.msra.mxu0 %v619
        %644 = vmatprep.subr.bf16.mxu0 0
        %645 = vmatpush1.bf16.msra.mxu0 0
        %646 = vmatprep.subr.bf16.mxu0 0
        %647 = vmatpush1.bf16.msra.mxu0 0
        %648 = vmatprep.subr.bf16.mxu0 0
        %649 = vmatpush1.bf16.msra.mxu0 0
        %650 = vmatprep.subr.bf16.mxu0 0
        %651 = vmatpush1.bf16.msra.mxu0 0
        %652 = vmatprep.subr.bf16.mxu0 0
        %653 = vmatpush1.bf16.msra.mxu0 0
        %654 = vmatprep.subr.bf16.mxu0 0
        %655 = vmatpush1.bf16.msra.mxu0 0
        %656 = vmatprep.subr.bf16.mxu0 0
        %657 = vmatpush1.bf16.msra.mxu0 0
        %658 = vmatprep.subr.bf16.mxu0 0
        %659 = vmatpush1.bf16.msra.mxu0 0
        %660 = vmatprep.mubr.bf16.mxu0 0
        %661 = vmatmul.mubr.bf16.gmra.mrb[0].mxu0 %v578
        %v662 = vpop.f32.mrb[0].mxu0
        %v663 = vadd.f32 0.0, %v662
        %v664 = vpop.f32.mrb[0].mxu0
        %v665 = vpop.f32.mrb[0].mxu0
        %v666 = vadd.f32 0.0, %v665
        %v667 = vpop.f32.mrb[0].mxu0
        %668 = vdwg.mxu0
        %v669 = vmax.f32 %v663, 0.0
        %v670 = vmax.f32 %v666, 0.0
        %v671 = vlaneseq
        %v672 = vshrl.u32 %v671, 7
        %v673 = vadd.s32 %v672, 8
        %vm674 = vcmp.lt.s32.totalorder %v672, 0
        %v675 = vsub.s32 0, %v672
        %v676 = vsel %vm674, %v675, %v672
        %v677 = vshrl.u32 %v676, 1
        %v678 = vand.u32 %v676, 1
        %v679 = vsub.s32 0, %v678
        %v680 = vsel %vm674, %v679, %v678
        %vm681 = vcmp.lt.s32.totalorder %v673, 0
        %v682 = vsub.s32 0, %v673
        %v683 = vsel %vm681, %v682, %v673
        %v684 = vshrl.u32 %v683, 1
        %v685 = vand.u32 %v683, 1
        %v686 = vsub.s32 0, %v685
        %v687 = vsel %vm681, %v686, %v685
        %vm688 = vcmp.ne.s32.totalorder %v680, 0
        %vm689 = vcmp.ne.s32.totalorder %v687, 0
        %vm690 = vcmp.lt.s32.totalorder %v680, 0
        %vm691 = vcmp.lt.s32.totalorder %v687, 0
        %vm692 = vmand %vm690, %vm688
        %vm693 = vmand %vm691, %vm689
        %v694 = vadd.s32 %v680, 2
        %v695 = vadd.s32 %v687, 2
        %v696 = vsel %vm692, %v694, %v680
        %v697 = vsel %vm693, %v695, %v687
        %vm698 = vcmp.eq.s32.totalorder %v696, 0
        %vm699 = vcmp.eq.s32.totalorder %v697, 0
        %v700 = vpack.c.bf16 %v670, %v669
        %v703 = vunpack.c.l.b16 %v540
        %v704 = vunpack.c.l.b16 %v541
        %v705 = vpack.c.b16 %v704, %v703
        %vm706 = vcmask 130048
        %v708 = vsel %vm706, %v705, 0
        %710 = vmatprep.subr.bf16.mxu0 0
        %711 = vmatpush1.bf16.msra.mxu0 %v700
        %712 = vmatprep.subr.bf16.mxu0 0
        %713 = vmatpush1.bf16.msra.mxu0 0
        %714 = vmatprep.subr.bf16.mxu0 0
        %715 = vmatpush1.bf16.msra.mxu0 0
        %716 = vmatprep.subr.bf16.mxu0 0
        %717 = vmatpush1.bf16.msra.mxu0 0
        %718 = vmatprep.subr.bf16.mxu0 0
        %719 = vmatpush1.bf16.msra.mxu0 0
        %720 = vmatprep.subr.bf16.mxu0 0
        %721 = vmatpush1.bf16.msra.mxu0 0
        %722 = vmatprep.subr.bf16.mxu0 0
        %723 = vmatpush1.bf16.msra.mxu0 0
        %724 = vmatprep.subr.bf16.mxu0 0
        %725 = vmatpush1.bf16.msra.mxu0 0
        %726 = vmatprep.subr.bf16.mxu0 0
        %727 = vmatpush1.bf16.msra.mxu0 0
        %728 = vmatprep.subr.bf16.mxu0 0
        %729 = vmatpush1.bf16.msra.mxu0 0
        %730 = vmatprep.subr.bf16.mxu0 0
        %731 = vmatpush1.bf16.msra.mxu0 0
        %732 = vmatprep.subr.bf16.mxu0 0
        %733 = vmatpush1.bf16.msra.mxu0 0
        %734 = vmatprep.subr.bf16.mxu0 0
        %735 = vmatpush1.bf16.msra.mxu0 0
        %736 = vmatprep.subr.bf16.mxu0 0
        %737 = vmatpush1.bf16.msra.mxu0 0
        %738 = vmatprep.subr.bf16.mxu0 0
        %739 = vmatpush1.bf16.msra.mxu0 0
        %740 = vmatprep.subr.bf16.mxu0 0
        %741 = vmatpush1.bf16.msra.mxu0 0
        %742 = vmatprep.mubr.bf16.mxu0 0
        %743 = vmatmul.mubr.bf16.gmra.mrb[0].mxu0 %v708
        %v744 = vpop.f32.mrb[0].mxu0
        %v745 = vadd.f32 0.0, %v744
        %v746 = vpop.f32.mrb[0].mxu0
        %v747 = vpop.f32.mrb[0].mxu0
        %v748 = vadd.f32 0.0, %v747
        %v749 = vpop.f32.mrb[0].mxu0
        %750 = vdwg.mxu0
        %751 = vst [vmem:[#allocation2] sm:$0xff] %v745
        %752 = vst [vmem:[#allocation2 + $0x8] sm:$0xff] %v748
        %s753 = smul.u32 %s37, 128
        %s754 = sld [smem:[#allocation5 + %s753]]
        %s755 = scalar_lea.vmem [#allocation2], %s754
        %v756 = vld [vmem:[%s755] sm:$0x1]
        %757 = vst [vmem:[#allocation3] sm:$0x1] %v756
        %s758 = sadd.s32 %s753, 1
        %s759 = sld [smem:[#allocation5 + %s758]]
        %s760 = scalar_lea.vmem [#allocation2], %s759
        %v761 = vld [vmem:[%s760] sm:$0x1]
        %762 = vst [vmem:[#allocation3 + $0x1] sm:$0x1] %v761
        %s763 = sadd.s32 %s753, 2
        %s764 = sld [smem:[#allocation5 + %s763]]
        %s765 = scalar_lea.vmem [#allocation2], %s764
        %v766 = vld [vmem:[%s765] sm:$0x1]
        %767 = vst [vmem:[#allocation3 + $0x2] sm:$0x1] %v766
        %s768 = sadd.s32 %s753, 3
        %s769 = sld [smem:[#allocation5 + %s768]]
        %s770 = scalar_lea.vmem [#allocation2], %s769
        %v771 = vld [vmem:[%s770] sm:$0x1]
        %772 = vst [vmem:[#allocation3 + $0x3] sm:$0x1] %v771
        %s773 = sadd.s32 %s753, 4
        %s774 = sld [smem:[#allocation5 + %s773]]
        %s775 = scalar_lea.vmem [#allocation2], %s774
        %v776 = vld [vmem:[%s775] sm:$0x1]
        %777 = vst [vmem:[#allocation3 + $0x4] sm:$0x1] %v776
        %s778 = sadd.s32 %s753, 5
        %s779 = sld [smem:[#allocation5 + %s778]]
        %s780 = scalar_lea.vmem [#allocation2], %s779
        %v781 = vld [vmem:[%s780] sm:$0x1]
        %782 = vst [vmem:[#allocation3 + $0x5] sm:$0x1] %v781
        %s783 = sadd.s32 %s753, 6
        %s784 = sld [smem:[#allocation5 + %s783]]
        %s785 = scalar_lea.vmem [#allocation2], %s784
        %v786 = vld [vmem:[%s785] sm:$0x1]
        %787 = vst [vmem:[#allocation3 + $0x6] sm:$0x1] %v786
        %s788 = sadd.s32 %s753, 7
        %s789 = sld [smem:[#allocation5 + %s788]]
        %s790 = scalar_lea.vmem [#allocation2], %s789
        %v791 = vld [vmem:[%s790] sm:$0x1]
        %792 = vst [vmem:[#allocation3 + $0x7] sm:$0x1] %v791
        %s793 = sadd.s32 %s753, 8
        %s794 = sld [smem:[#allocation5 + %s793]]
        %s795 = scalar_lea.vmem [#allocation2], %s794
        %v796 = vld [vmem:[%s795] sm:$0x1]
        %797 = vst [vmem:[#allocation3 + $0x8] sm:$0x1] %v796
        %s798 = sadd.s32 %s753, 9
        %s799 = sld [smem:[#allocation5 + %s798]]
        %s800 = scalar_lea.vmem [#allocation2], %s799
        %v801 = vld [vmem:[%s800] sm:$0x1]
        %802 = vst [vmem:[#allocation3 + $0x9] sm:$0x1] %v801
        %s803 = sadd.s32 %s753, 10
        %s804 = sld [smem:[#allocation5 + %s803]]
        %s805 = scalar_lea.vmem [#allocation2], %s804
        %v806 = vld [vmem:[%s805] sm:$0x1]
        %807 = vst [vmem:[#allocation3 + $0xa] sm:$0x1] %v806
        %s808 = sadd.s32 %s753, 11
        %s809 = sld [smem:[#allocation5 + %s808]]
        %s810 = scalar_lea.vmem [#allocation2], %s809
        %v811 = vld [vmem:[%s810] sm:$0x1]
        %812 = vst [vmem:[#allocation3 + $0xb] sm:$0x1] %v811
        %s813 = sadd.s32 %s753, 12
        %s814 = sld [smem:[#allocation5 + %s813]]
        %s815 = scalar_lea.vmem [#allocation2], %s814
        %v816 = vld [vmem:[%s815] sm:$0x1]
        %817 = vst [vmem:[#allocation3 + $0xc] sm:$0x1] %v816
        %s818 = sadd.s32 %s753, 13
        %s819 = sld [smem:[#allocation5 + %s818]]
        %s820 = scalar_lea.vmem [#allocation2], %s819
        %v821 = vld [vmem:[%s820] sm:$0x1]
        %822 = vst [vmem:[#allocation3 + $0xd] sm:$0x1] %v821
        %s823 = sadd.s32 %s753, 14
        %s824 = sld [smem:[#allocation5 + %s823]]
        %s825 = scalar_lea.vmem [#allocation2], %s824
        %v826 = vld [vmem:[%s825] sm:$0x1]
        %827 = vst [vmem:[#allocation3 + $0xe] sm:$0x1] %v826
        %s828 = sadd.s32 %s753, 15
        %s829 = sld [smem:[#allocation5 + %s828]]
        %s830 = scalar_lea.vmem [#allocation2], %s829
        %v831 = vld [vmem:[%s830] sm:$0x1]
        %832 = vst [vmem:[#allocation3 + $0xf] sm:$0x1] %v831
        %v833 = vrot.slane %v669, 1
        %v834 = vrot.slane %v670, 1
        %vm835 = vcmp.lt.s32.totalorder %v672, 7
        %v836 = vsel %vm835, %v833, %v834
        %v837 = vsel %vm835, %v834, %v833
        %v838 = vrot.slane %v669, 7
        %v839 = vrot.slane %v670, 7
        %vm840 = vcmp.lt.s32.totalorder %v672, 1
        %v841 = vsel %vm840, %v838, %v839
        %v842 = vsel %vm840, %v839, %v838
        %v843 = vsel %vm698, 1, 0
        %v844 = vsel %vm699, 1, 0
        %vm845 = vcmp.eq.s32.totalorder %v843, 1
        %vm846 = vcmp.eq.s32.totalorder %v844, 1
        %v847 = vsel %vm845, %v836, %v842
        %v848 = vsel %vm846, %v837, %v841
        %v849 = vld [vmem:[#allocation3] sm:$0xff]
        %v850 = vld [vmem:[#allocation3 + $0x8] sm:$0xff]
        %v851 = vsub.f32 %v849, %v847
        %v852 = vsub.f32 %v850, %v848
        %v853 = vpack.c.bf16 %v852, %v851
        %v870 = vunpack.c.l.b16 %v558
        %v871 = vunpack.c.l.b16 %v559
        %v872 = vunpack.c.l.b16 %v560
        %v873 = vunpack.c.l.b16 %v561
        %v874 = vunpack.c.l.b16 %v562
        %v875 = vunpack.c.l.b16 %v563
        %v876 = vunpack.c.l.b16 %v564
        %v877 = vunpack.c.l.b16 %v565
        %v878 = vunpack.c.l.b16 %v566
        %v879 = vunpack.c.l.b16 %v567
        %v880 = vunpack.c.l.b16 %v568
        %v881 = vunpack.c.l.b16 %v569
        %v882 = vunpack.c.l.b16 %v570
        %v883 = vunpack.c.l.b16 %v571
        %v884 = vunpack.c.l.b16 %v572
        %v885 = vunpack.c.l.b16 %v573
        %v886 = vpack.c.b16 %v871, %v870
        %v887 = vpack.c.b16 %v873, %v872
        %v888 = vpack.c.b16 %v875, %v874
        %v889 = vpack.c.b16 %v877, %v876
        %v890 = vpack.c.b16 %v879, %v878
        %v891 = vpack.c.b16 %v881, %v880
        %v892 = vpack.c.b16 %v883, %v882
        %v893 = vpack.c.b16 %v885, %v884
        %902 = vmatprep.subr.bf16.mxu0 0
        %903 = vmatpush1.bf16.msra.mxu0 %v886
        %904 = vmatprep.subr.bf16.mxu0 0
        %905 = vmatpush1.bf16.msra.mxu0 %v887
        %906 = vmatprep.subr.bf16.mxu0 0
        %907 = vmatpush1.bf16.msra.mxu0 %v888
        %908 = vmatprep.subr.bf16.mxu0 0
        %909 = vmatpush1.bf16.msra.mxu0 %v889
        %910 = vmatprep.subr.bf16.mxu0 0
        %911 = vmatpush1.bf16.msra.mxu0 %v890
        %912 = vmatprep.subr.bf16.mxu0 0
        %913 = vmatpush1.bf16.msra.mxu0 %v891
        %914 = vmatprep.subr.bf16.mxu0 0
        %915 = vmatpush1.bf16.msra.mxu0 %v892
        %916 = vmatprep.subr.bf16.mxu0 0
        %917 = vmatpush1.bf16.msra.mxu0 %v893
        %918 = vmatprep.subr.bf16.mxu0 0
        %919 = vmatpush1.bf16.msra.mxu0 0
        %920 = vmatprep.subr.bf16.mxu0 0
        %921 = vmatpush1.bf16.msra.mxu0 0
        %922 = vmatprep.subr.bf16.mxu0 0
        %923 = vmatpush1.bf16.msra.mxu0 0
        %924 = vmatprep.subr.bf16.mxu0 0
        %925 = vmatpush1.bf16.msra.mxu0 0
        %926 = vmatprep.subr.bf16.mxu0 0
        %927 = vmatpush1.bf16.msra.mxu0 0
        %928 = vmatprep.subr.bf16.mxu0 0
        %929 = vmatpush1.bf16.msra.mxu0 0
        %930 = vmatprep.subr.bf16.mxu0 0
        %931 = vmatpush1.bf16.msra.mxu0 0
        %932 = vmatprep.subr.bf16.mxu0 0
        %933 = vmatpush1.bf16.msra.mxu0 0
        %934 = vmatprep.mubr.bf16.mxu0 0
        %935 = vmatmul.mubr.bf16.gmra.mrb[0].mxu0 %v853
        %v936 = vpop.f32.mrb[0].mxu0
        %v937 = vadd.f32 0.0, %v936
        %v938 = vpop.f32.mrb[0].mxu0
        %v939 = vpop.f32.mrb[0].mxu0
        %v940 = vadd.f32 0.0, %v939
        %v941 = vpop.f32.mrb[0].mxu0
        %942 = vdwg.mxu0
        %v943 = vadd.f32 %v663, %v937
        %v944 = vadd.f32 %v666, %v940
        %v945 = vmax.f32 %v943, 0.0
        %v946 = vmax.f32 %v944, 0.0
        %v947 = vpack.c.bf16 %v946, %v945
        %948 = vmatprep.subr.bf16.mxu0 0
        %949 = vmatpush1.bf16.msra.mxu0 %v947
        %950 = vmatprep.subr.bf16.mxu0 0
        %951 = vmatpush1.bf16.msra.mxu0 0
        %952 = vmatprep.subr.bf16.mxu0 0
        %953 = vmatpush1.bf16.msra.mxu0 0
        %954 = vmatprep.subr.bf16.mxu0 0
        %955 = vmatpush1.bf16.msra.mxu0 0
        %956 = vmatprep.subr.bf16.mxu0 0
        %957 = vmatpush1.bf16.msra.mxu0 0
        %958 = vmatprep.subr.bf16.mxu0 0
        %959 = vmatpush1.bf16.msra.mxu0 0
        %960 = vmatprep.subr.bf16.mxu0 0
        %961 = vmatpush1.bf16.msra.mxu0 0
        %962 = vmatprep.subr.bf16.mxu0 0
        %963 = vmatpush1.bf16.msra.mxu0 0
        %964 = vmatprep.subr.bf16.mxu0 0
        %965 = vmatpush1.bf16.msra.mxu0 0
        %966 = vmatprep.subr.bf16.mxu0 0
        %967 = vmatpush1.bf16.msra.mxu0 0
        %968 = vmatprep.subr.bf16.mxu0 0
        %969 = vmatpush1.bf16.msra.mxu0 0
        %970 = vmatprep.subr.bf16.mxu0 0
        %971 = vmatpush1.bf16.msra.mxu0 0
        %972 = vmatprep.subr.bf16.mxu0 0
        %973 = vmatpush1.bf16.msra.mxu0 0
        %974 = vmatprep.subr.bf16.mxu0 0
        %975 = vmatpush1.bf16.msra.mxu0 0
        %976 = vmatprep.subr.bf16.mxu0 0
        %977 = vmatpush1.bf16.msra.mxu0 0
        %978 = vmatprep.subr.bf16.mxu0 0
        %979 = vmatpush1.bf16.msra.mxu0 0
        %980 = vmatprep.mubr.bf16.mxu0 0
        %981 = vmatmul.mubr.bf16.gmra.mrb[0].mxu0 %v708
        %v982 = vpop.f32.mrb[0].mxu0
        %v983 = vadd.f32 0.0, %v982
        %v984 = vpop.f32.mrb[0].mxu0
        %v985 = vpop.f32.mrb[0].mxu0
        %v986 = vadd.f32 0.0, %v985
        %v987 = vpop.f32.mrb[0].mxu0
        %988 = vdwg.mxu0
        %989 = vst [vmem:[#allocation2] sm:$0xff] %v983
        %990 = vst [vmem:[#allocation2 + $0x8] sm:$0xff] %v986
        %s991 = sld [smem:[#allocation5 + %s753]]
        %s992 = scalar_lea.vmem [#allocation2], %s991
        %v993 = vld [vmem:[%s992] sm:$0x1]
        %994 = vst [vmem:[#allocation3] sm:$0x1] %v993
        %s995 = sld [smem:[#allocation5 + %s758]]
        %s996 = scalar_lea.vmem [#allocation2], %s995
        %v997 = vld [vmem:[%s996] sm:$0x1]
        %998 = vst [vmem:[#allocation3 + $0x1] sm:$0x1] %v997
        %s999 = sld [smem:[#allocation5 + %s763]]
        %s1000 = scalar_lea.vmem [#allocation2], %s999
        %v1001 = vld [vmem:[%s1000] sm:$0x1]
        %1002 = vst [vmem:[#allocation3 + $0x2] sm:$0x1] %v1001
        %s1003 = sld [smem:[#allocation5 + %s768]]
        %s1004 = scalar_lea.vmem [#allocation2], %s1003
        %v1005 = vld [vmem:[%s1004] sm:$0x1]
        %1006 = vst [vmem:[#allocation3 + $0x3] sm:$0x1] %v1005
        %s1007 = sld [smem:[#allocation5 + %s773]]
        %s1008 = scalar_lea.vmem [#allocation2], %s1007
        %v1009 = vld [vmem:[%s1008] sm:$0x1]
        %1010 = vst [vmem:[#allocation3 + $0x4] sm:$0x1] %v1009
        %s1011 = sld [smem:[#allocation5 + %s778]]
        %s1012 = scalar_lea.vmem [#allocation2], %s1011
        %v1013 = vld [vmem:[%s1012] sm:$0x1]
        %1014 = vst [vmem:[#allocation3 + $0x5] sm:$0x1] %v1013
        %s1015 = sld [smem:[#allocation5 + %s783]]
        %s1016 = scalar_lea.vmem [#allocation2], %s1015
        %v1017 = vld [vmem:[%s1016] sm:$0x1]
        %1018 = vst [vmem:[#allocation3 + $0x6] sm:$0x1] %v1017
        %s1019 = sld [smem:[#allocation5 + %s788]]
        %s1020 = scalar_lea.vmem [#allocation2], %s1019
        %v1021 = vld [vmem:[%s1020] sm:$0x1]
        %1022 = vst [vmem:[#allocation3 + $0x7] sm:$0x1] %v1021
        %s1023 = sld [smem:[#allocation5 + %s793]]
        %s1024 = scalar_lea.vmem [#allocation2], %s1023
        %v1025 = vld [vmem:[%s1024] sm:$0x1]
        %1026 = vst [vmem:[#allocation3 + $0x8] sm:$0x1] %v1025
        %s1027 = sld [smem:[#allocation5 + %s798]]
        %s1028 = scalar_lea.vmem [#allocation2], %s1027
        %v1029 = vld [vmem:[%s1028] sm:$0x1]
        %1030 = vst [vmem:[#allocation3 + $0x9] sm:$0x1] %v1029
        %s1031 = sld [smem:[#allocation5 + %s803]]
        %s1032 = scalar_lea.vmem [#allocation2], %s1031
        %v1033 = vld [vmem:[%s1032] sm:$0x1]
        %1034 = vst [vmem:[#allocation3 + $0xa] sm:$0x1] %v1033
        %s1035 = sld [smem:[#allocation5 + %s808]]
        %s1036 = scalar_lea.vmem [#allocation2], %s1035
        %v1037 = vld [vmem:[%s1036] sm:$0x1]
        %1038 = vst [vmem:[#allocation3 + $0xb] sm:$0x1] %v1037
        %s1039 = sld [smem:[#allocation5 + %s813]]
        %s1040 = scalar_lea.vmem [#allocation2], %s1039
        %v1041 = vld [vmem:[%s1040] sm:$0x1]
        %1042 = vst [vmem:[#allocation3 + $0xc] sm:$0x1] %v1041
        %s1043 = sld [smem:[#allocation5 + %s818]]
        %s1044 = scalar_lea.vmem [#allocation2], %s1043
        %v1045 = vld [vmem:[%s1044] sm:$0x1]
        %1046 = vst [vmem:[#allocation3 + $0xd] sm:$0x1] %v1045
        %s1047 = sld [smem:[#allocation5 + %s823]]
        %s1048 = scalar_lea.vmem [#allocation2], %s1047
        %v1049 = vld [vmem:[%s1048] sm:$0x1]
        %1050 = vst [vmem:[#allocation3 + $0xe] sm:$0x1] %v1049
        %s1051 = sld [smem:[#allocation5 + %s828]]
        %s1052 = scalar_lea.vmem [#allocation2], %s1051
        %v1053 = vld [vmem:[%s1052] sm:$0x1]
        %1054 = vst [vmem:[#allocation3 + $0xf] sm:$0x1] %v1053
        %v1055 = vrot.slane %v945, 1
        %v1056 = vrot.slane %v946, 1
        %v1057 = vsel %vm835, %v1055, %v1056
        %v1058 = vsel %vm835, %v1056, %v1055
        %v1059 = vrot.slane %v945, 7
        %v1060 = vrot.slane %v946, 7
        %v1061 = vsel %vm840, %v1059, %v1060
        %v1062 = vsel %vm840, %v1060, %v1059
        %v1063 = vsel %vm845, %v1057, %v1062
        %v1064 = vsel %vm846, %v1058, %v1061
        %v1065 = vld [vmem:[#allocation3] sm:$0xff]
        %v1066 = vld [vmem:[#allocation3 + $0x8] sm:$0xff]
        %v1067 = vsub.f32 %v1065, %v1063
        %v1068 = vsub.f32 %v1066, %v1064
        %v1069 = vpack.c.bf16 %v1068, %v1067
        %1070 = vmatprep.subr.bf16.mxu0 0
        %1071 = vmatpush1.bf16.msra.mxu0 %v886
        %1072 = vmatprep.subr.bf16.mxu0 0
        %1073 = vmatpush1.bf16.msra.mxu0 %v887
        %1074 = vmatprep.subr.bf16.mxu0 0
        %1075 = vmatpush1.bf16.msra.mxu0 %v888
        %1076 = vmatprep.subr.bf16.mxu0 0
        %1077 = vmatpush1.bf16.msra.mxu0 %v889
        %1078 = vmatprep.subr.bf16.mxu0 0
        %1079 = vmatpush1.bf16.msra.mxu0 %v890
        %1080 = vmatprep.subr.bf16.mxu0 0
        %1081 = vmatpush1.bf16.msra.mxu0 %v891
        %1082 = vmatprep.subr.bf16.mxu0 0
        %1083 = vmatpush1.bf16.msra.mxu0 %v892
        %1084 = vmatprep.subr.bf16.mxu0 0
        %1085 = vmatpush1.bf16.msra.mxu0 %v893
        %1086 = vmatprep.subr.bf16.mxu0 0
        %1087 = vmatpush1.bf16.msra.mxu0 0
        %1088 = vmatprep.subr.bf16.mxu0 0
        %1089 = vmatpush1.bf16.msra.mxu0 0
        %1090 = vmatprep.subr.bf16.mxu0 0
        %1091 = vmatpush1.bf16.msra.mxu0 0
        %1092 = vmatprep.subr.bf16.mxu0 0
        %1093 = vmatpush1.bf16.msra.mxu0 0
        %1094 = vmatprep.subr.bf16.mxu0 0
        %1095 = vmatpush1.bf16.msra.mxu0 0
        %1096 = vmatprep.subr.bf16.mxu0 0
        %1097 = vmatpush1.bf16.msra.mxu0 0
        %1098 = vmatprep.subr.bf16.mxu0 0
        %1099 = vmatpush1.bf16.msra.mxu0 0
        %1100 = vmatprep.subr.bf16.mxu0 0
        %1101 = vmatpush1.bf16.msra.mxu0 0
        %1102 = vmatprep.mubr.bf16.mxu0 0
        %1103 = vmatmul.mubr.bf16.gmra.mrb[0].mxu0 %v1069
        %v1104 = vpop.f32.mrb[0].mxu0
        %v1105 = vadd.f32 0.0, %v1104
        %v1106 = vpop.f32.mrb[0].mxu0
        %v1107 = vpop.f32.mrb[0].mxu0
        %v1108 = vadd.f32 0.0, %v1107
        %v1109 = vpop.f32.mrb[0].mxu0
        %1110 = vdwg.mxu0
        %v1111 = vadd.f32 %v663, %v1105
        %v1112 = vadd.f32 %v666, %v1108
        %v1113 = vmax.f32 %v1111, 0.0
        %v1114 = vmax.f32 %v1112, 0.0
        %v1115 = vpack.c.bf16 %v1114, %v1113
        %1116 = vmatprep.subr.bf16.mxu0 0
        %1117 = vmatpush1.bf16.msra.mxu0 %v1115
        %1118 = vmatprep.subr.bf16.mxu0 0
        %1119 = vmatpush1.bf16.msra.mxu0 0
        %1120 = vmatprep.subr.bf16.mxu0 0
        %1121 = vmatpush1.bf16.msra.mxu0 0
        %1122 = vmatprep.subr.bf16.mxu0 0
        %1123 = vmatpush1.bf16.msra.mxu0 0
        %1124 = vmatprep.subr.bf16.mxu0 0
        %1125 = vmatpush1.bf16.msra.mxu0 0
        %1126 = vmatprep.subr.bf16.mxu0 0
        %1127 = vmatpush1.bf16.msra.mxu0 0
        %1128 = vmatprep.subr.bf16.mxu0 0
        %1129 = vmatpush1.bf16.msra.mxu0 0
        %1130 = vmatprep.subr.bf16.mxu0 0
        %1131 = vmatpush1.bf16.msra.mxu0 0
        %1132 = vmatprep.subr.bf16.mxu0 0
        %1133 = vmatpush1.bf16.msra.mxu0 0
        %1134 = vmatprep.subr.bf16.mxu0 0
        %1135 = vmatpush1.bf16.msra.mxu0 0
        %1136 = vmatprep.subr.bf16.mxu0 0
        %1137 = vmatpush1.bf16.msra.mxu0 0
        %1138 = vmatprep.subr.bf16.mxu0 0
        %1139 = vmatpush1.bf16.msra.mxu0 0
        %1140 = vmatprep.subr.bf16.mxu0 0
        %1141 = vmatpush1.bf16.msra.mxu0 0
        %1142 = vmatprep.subr.bf16.mxu0 0
        %1143 = vmatpush1.bf16.msra.mxu0 0
        %1144 = vmatprep.subr.bf16.mxu0 0
        %1145 = vmatpush1.bf16.msra.mxu0 0
        %1146 = vmatprep.subr.bf16.mxu0 0
        %1147 = vmatpush1.bf16.msra.mxu0 0
        %1148 = vmatprep.mubr.bf16.mxu0 0
        %1149 = vmatmul.mubr.bf16.gmra.mrb[0].mxu0 %v708
        %v1150 = vpop.f32.mrb[0].mxu0
        %v1151 = vadd.f32 0.0, %v1150
        %v1152 = vpop.f32.mrb[0].mxu0
        %v1153 = vpop.f32.mrb[0].mxu0
        %v1154 = vadd.f32 0.0, %v1153
        %v1155 = vpop.f32.mrb[0].mxu0
        %1156 = vdwg.mxu0
        %v1157 = vld [vmem:[#allocation14] sm:$0xf]
        %v1158 = vld [vmem:[#allocation14 + $0x4] sm:$0xf]
        %v1159 = vld [vmem:[#allocation14 + $0x8] sm:$0xf]
        %v1160 = vld [vmem:[#allocation14 + $0xc] sm:$0xf]
        %v1161 = vld [vmem:[#allocation14 + $0x10] sm:$0xf]
        %v1162 = vld [vmem:[#allocation14 + $0x14] sm:$0xf]
        %v1163 = vld [vmem:[#allocation14 + $0x18] sm:$0xf]
        %v1164 = vld [vmem:[#allocation14 + $0x1c] sm:$0xf]
        %v1165 = vld [vmem:[#allocation14 + $0x20] sm:$0xf]
        %v1166 = vld [vmem:[#allocation14 + $0x24] sm:$0xf]
        %v1167 = vld [vmem:[#allocation14 + $0x28] sm:$0xf]
        %v1168 = vld [vmem:[#allocation14 + $0x2c] sm:$0xf]
        %v1169 = vld [vmem:[#allocation14 + $0x30] sm:$0xf]
        %v1170 = vld [vmem:[#allocation14 + $0x34] sm:$0xf]
        %v1171 = vld [vmem:[#allocation14 + $0x38] sm:$0xf]
        %v1172 = vld [vmem:[#allocation14 + $0x3c] sm:$0xf]
        %v1173 = vpack.c.bf16 %v1154, %v1151
        %v1174 = vld [vmem:[#allocation15] sm:$0xf]
        %v1175 = vld [vmem:[#allocation15 + $0x4] sm:$0xf]
        %v1176 = vld [vmem:[#allocation15 + $0x8] sm:$0xf]
        %v1177 = vld [vmem:[#allocation15 + $0xc] sm:$0xf]
        %v1178 = vld [vmem:[#allocation15 + $0x10] sm:$0xf]
        %v1179 = vld [vmem:[#allocation15 + $0x14] sm:$0xf]
        %v1180 = vld [vmem:[#allocation15 + $0x18] sm:$0xf]
        %v1181 = vld [vmem:[#allocation15 + $0x1c] sm:$0xf]
        %v1182 = vld [vmem:[#allocation15 + $0x20] sm:$0xf]
        %v1183 = vld [vmem:[#allocation15 + $0x24] sm:$0xf]
        %v1184 = vld [vmem:[#allocation15 + $0x28] sm:$0xf]
        %v1185 = vld [vmem:[#allocation15 + $0x2c] sm:$0xf]
        %v1186 = vld [vmem:[#allocation15 + $0x30] sm:$0xf]
        %v1187 = vld [vmem:[#allocation15 + $0x34] sm:$0xf]
        %v1188 = vld [vmem:[#allocation15 + $0x38] sm:$0xf]
        %v1189 = vld [vmem:[#allocation15 + $0x3c] sm:$0xf]
        %v1206 = vunpack.c.l.b16 %v1174
        %v1207 = vunpack.c.l.b16 %v1175
        %v1208 = vunpack.c.l.b16 %v1176
        %v1209 = vunpack.c.l.b16 %v1177
        %v1210 = vunpack.c.l.b16 %v1178
        %v1211 = vunpack.c.l.b16 %v1179
        %v1212 = vunpack.c.l.b16 %v1180
        %v1213 = vunpack.c.l.b16 %v1181
        %v1214 = vunpack.c.l.b16 %v1182
        %v1215 = vunpack.c.l.b16 %v1183
        %v1216 = vunpack.c.l.b16 %v1184
        %v1217 = vunpack.c.l.b16 %v1185
        %v1218 = vunpack.c.l.b16 %v1186
        %v1219 = vunpack.c.l.b16 %v1187
        %v1220 = vunpack.c.l.b16 %v1188
        %v1221 = vunpack.c.l.b16 %v1189
        %v1222 = vpack.c.b16 %v1207, %v1206
        %v1223 = vpack.c.b16 %v1209, %v1208
        %v1224 = vpack.c.b16 %v1211, %v1210
        %v1225 = vpack.c.b16 %v1213, %v1212
        %v1226 = vpack.c.b16 %v1215, %v1214
        %v1227 = vpack.c.b16 %v1217, %v1216
        %v1228 = vpack.c.b16 %v1219, %v1218
        %v1229 = vpack.c.b16 %v1221, %v1220
        %1238 = vmatprep.subr.bf16.mxu0 0
        %1239 = vmatpush1.bf16.msra.mxu0 %v1222
        %1240 = vmatprep.subr.bf16.mxu0 0
        %1241 = vmatpush1.bf16.msra.mxu0 %v1223
        %1242 = vmatprep.subr.bf16.mxu0 0
        %1243 = vmatpush1.bf16.msra.mxu0 %v1224
        %1244 = vmatprep.subr.bf16.mxu0 0
        %1245 = vmatpush1.bf16.msra.mxu0 %v1225
        %1246 = vmatprep.subr.bf16.mxu0 0
        %1247 = vmatpush1.bf16.msra.mxu0 %v1226
        %1248 = vmatprep.subr.bf16.mxu0 0
        %1249 = vmatpush1.bf16.msra.mxu0 %v1227
        %1250 = vmatprep.subr.bf16.mxu0 0
        %1251 = vmatpush1.bf16.msra.mxu0 %v1228
        %1252 = vmatprep.subr.bf16.mxu0 0
        %1253 = vmatpush1.bf16.msra.mxu0 %v1229
        %1254 = vmatprep.subr.bf16.mxu0 0
        %1255 = vmatpush1.bf16.msra.mxu0 0
        %1256 = vmatprep.subr.bf16.mxu0 0
        %1257 = vmatpush1.bf16.msra.mxu0 0
        %1258 = vmatprep.subr.bf16.mxu0 0
        %1259 = vmatpush1.bf16.msra.mxu0 0
        %1260 = vmatprep.subr.bf16.mxu0 0
        %1261 = vmatpush1.bf16.msra.mxu0 0
        %1262 = vmatprep.subr.bf16.mxu0 0
        %1263 = vmatpush1.bf16.msra.mxu0 0
        %1264 = vmatprep.subr.bf16.mxu0 0
        %1265 = vmatpush1.bf16.msra.mxu0 0
        %1266 = vmatprep.subr.bf16.mxu0 0
        %1267 = vmatpush1.bf16.msra.mxu0 0
        %1268 = vmatprep.subr.bf16.mxu0 0
        %1269 = vmatpush1.bf16.msra.mxu0 0
        %1270 = vmatprep.mubr.bf16.mxu0 0
        %1271 = vmatmul.mubr.bf16.gmra.mrb[0].mxu0 %v1173
        %v1272 = vpop.f32.mrb[0].mxu0
        %v1273 = vadd.f32 0.0, %v1272
        %v1274 = vpop.f32.mrb[0].mxu0
        %v1275 = vpop.f32.mrb[0].mxu0
        %v1276 = vadd.f32 0.0, %v1275
        %v1277 = vpop.f32.mrb[0].mxu0
        %1278 = vdwg.mxu0
        %v1281 = vunpack.c.l.b16 %v536
        %v1282 = vunpack.c.l.b16 %v537
        %v1283 = vpack.c.b16 %v1282, %v1281
        %v1301 = vunpack.c.l.b16 %v1157
        %v1302 = vunpack.c.l.b16 %v1158
        %v1303 = vunpack.c.l.b16 %v1159
        %v1304 = vunpack.c.l.b16 %v1160
        %v1305 = vunpack.c.l.b16 %v1161
        %v1306 = vunpack.c.l.b16 %v1162
        %v1307 = vunpack.c.l.b16 %v1163
        %v1308 = vunpack.c.l.b16 %v1164
        %v1309 = vunpack.c.l.b16 %v1165
        %v1310 = vunpack.c.l.b16 %v1166
        %v1311 = vunpack.c.l.b16 %v1167
        %v1312 = vunpack.c.l.b16 %v1168
        %v1313 = vunpack.c.l.b16 %v1169
        %v1314 = vunpack.c.l.b16 %v1170
        %v1315 = vunpack.c.l.b16 %v1171
        %v1316 = vunpack.c.l.b16 %v1172
        %v1317 = vpack.c.b16 %v1302, %v1301
        %v1318 = vpack.c.b16 %v1304, %v1303
        %v1319 = vpack.c.b16 %v1306, %v1305
        %v1320 = vpack.c.b16 %v1308, %v1307
        %v1321 = vpack.c.b16 %v1310, %v1309
        %v1322 = vpack.c.b16 %v1312, %v1311
        %v1323 = vpack.c.b16 %v1314, %v1313
        %v1324 = vpack.c.b16 %v1316, %v1315
        %1333 = vmatprep.subr.bf16.mxu0 0
        %1334 = vmatpush1.bf16.msra.mxu0 %v1317
        %1335 = vmatprep.subr.bf16.mxu0 0
        %1336 = vmatpush1.bf16.msra.mxu0 %v1318
        %1337 = vmatprep.subr.bf16.mxu0 0
        %1338 = vmatpush1.bf16.msra.mxu0 %v1319
        %1339 = vmatprep.subr.bf16.mxu0 0
        %1340 = vmatpush1.bf16.msra.mxu0 %v1320
        %1341 = vmatprep.subr.bf16.mxu0 0
        %1342 = vmatpush1.bf16.msra.mxu0 %v1321
        %1343 = vmatprep.subr.bf16.mxu0 0
        %1344 = vmatpush1.bf16.msra.mxu0 %v1322
        %1345 = vmatprep.subr.bf16.mxu0 0
        %1346 = vmatpush1.bf16.msra.mxu0 %v1323
        %1347 = vmatprep.subr.bf16.mxu0 0
        %1348 = vmatpush1.bf16.msra.mxu0 %v1324
        %1349 = vmatprep.subr.bf16.mxu0 0
        %1350 = vmatpush1.bf16.msra.mxu0 0
        %1351 = vmatprep.subr.bf16.mxu0 0
        %1352 = vmatpush1.bf16.msra.mxu0 0
        %1353 = vmatprep.subr.bf16.mxu0 0
        %1354 = vmatpush1.bf16.msra.mxu0 0
        %1355 = vmatprep.subr.bf16.mxu0 0
        %1356 = vmatpush1.bf16.msra.mxu0 0
        %1357 = vmatprep.subr.bf16.mxu0 0
        %1358 = vmatpush1.bf16.msra.mxu0 0
        %1359 = vmatprep.subr.bf16.mxu0 0
        %1360 = vmatpush1.bf16.msra.mxu0 0
        %1361 = vmatprep.subr.bf16.mxu0 0
        %1362 = vmatpush1.bf16.msra.mxu0 0
        %1363 = vmatprep.subr.bf16.mxu0 0
        %1364 = vmatpush1.bf16.msra.mxu0 0
        %1365 = vmatprep.mubr.bf16.mxu0 0
        %1366 = vmatmul.mubr.bf16.gmra.mrb[0].mxu0 %v1283
        %v1367 = vpop.f32.mrb[0].mxu0
        %v1368 = vadd.f32 %v1273, %v1367
        %v1369 = vpop.f32.mrb[0].mxu0
        %v1370 = vpop.f32.mrb[0].mxu0
        %v1371 = vadd.f32 %v1276, %v1370
        %v1372 = vpop.f32.mrb[0].mxu0
        %1373 = vdwg.mxu0
        %v1374 = vld [vmem:[%s10] sm:$0x1]
        %v1376 = vlaneseq
        %v1377 = vshrl.u32 %v1376, 7
        %v1378 = vsub.s32 0, %v1377
        %v1379 = vrot.slane %v1374, %v1378
        %v1381 = vadd.f32 %v1368, %v1379
        %v1382 = vadd.f32 %v1371, %v1379
        %v1383 = vmax.f32 %v1381, 0.0
        %v1384 = vmax.f32 %v1382, 0.0
        %v1385 = vld [vmem:[%s530] sm:$0xf]
        %v1386 = vpack.c.bf16 %v1384, %v1383
        %v1388 = vsel %vm706, %v1385, 0
        %1390 = vmatprep.subr.bf16.mxu0 0
        %1391 = vmatpush1.bf16.msra.mxu0 %v1386
        %1392 = vmatprep.subr.bf16.mxu0 0
        %1393 = vmatpush1.bf16.msra.mxu0 0
        %1394 = vmatprep.subr.bf16.mxu0 0
        %1395 = vmatpush1.bf16.msra.mxu0 0
        %1396 = vmatprep.subr.bf16.mxu0 0
        %1397 = vmatpush1.bf16.msra.mxu0 0
        %1398 = vmatprep.subr.bf16.mxu0 0
        %1399 = vmatpush1.bf16.msra.mxu0 0
        %1400 = vmatprep.subr.bf16.mxu0 0
        %1401 = vmatpush1.bf16.msra.mxu0 0
        %1402 = vmatprep.subr.bf16.mxu0 0
        %1403 = vmatpush1.bf16.msra.mxu0 0
        %1404 = vmatprep.subr.bf16.mxu0 0
        %1405 = vmatpush1.bf16.msra.mxu0 0
        %1406 = vmatprep.subr.bf16.mxu0 0
        %1407 = vmatpush1.bf16.msra.mxu0 0
        %1408 = vmatprep.subr.bf16.mxu0 0
        %1409 = vmatpush1.bf16.msra.mxu0 0
        %1410 = vmatprep.subr.bf16.mxu0 0
        %1411 = vmatpush1.bf16.msra.mxu0 0
        %1412 = vmatprep.subr.bf16.mxu0 0
        %1413 = vmatpush1.bf16.msra.mxu0 0
        %1414 = vmatprep.subr.bf16.mxu0 0
        %1415 = vmatpush1.bf16.msra.mxu0 0
        %1416 = vmatprep.subr.bf16.mxu0 0
        %1417 = vmatpush1.bf16.msra.mxu0 0
        %1418 = vmatprep.subr.bf16.mxu0 0
        %1419 = vmatpush1.bf16.msra.mxu0 0
        %1420 = vmatprep.subr.bf16.mxu0 0
        %1421 = vmatpush1.bf16.msra.mxu0 0
        %1422 = vmatprep.mubr.bf16.mxu0 0
        %1423 = vmatmul.mubr.bf16.gmra.mrb[0].mxu0 %v1388
        %v1424 = vpop.f32.mrb[0].mxu0
        %v1425 = vadd.f32 0.0, %v1424
        %v1426 = vpop.f32.mrb[0].mxu0
        %v1427 = vpop.f32.mrb[0].mxu0
        %v1428 = vpop.f32.mrb[0].mxu0
        %1429 = vdwg.mxu0
        %v1430 = vld [vmem:[%s534] sm:$0xff]
        %1432 = vset.pattern.permute.xlu0 0
        %1433 = vperm.xlu0 %1432, %v1430
        %v1434 = vpop.permute.xlu0 %1433
        %v1436 = vmul.f32 %v1425, %v1434
        %1437 = vst [vmem:[%s521] sm:$0xff] %v1436
        %s1438 = sand.u32 %s280, 1
        %s1439 = scalar_lea.sflag [#allocation8], %s1438
        %s1440 = sand.u32 %s280, 1
        %s1441 = smul.addr %s1440, 8
        %s1442 = scalar_lea.vmem [#allocation17], %s1441
        // Predicated region
        $region85: #{tpu_custom_call.1} parent=59 // pred_check
          %p1443 = pneg %p290
        $region86: #{tpu_custom_call.1} parent=59 // pred_check_branch
          %1445 = sbr.rel (%p1443) target = $region88
        $region87: #{tpu_custom_call.1} parent=59 // pred_region
          %s1447 = ssub.s32 128, 128
          %1448 = vsyncadd %s1439, %s1447
          %s1449 = smul.addr %s37, 128
          %s1450 = scalar_lea.hbm %s11, %s1449
          %s1452 = sshll.u32 %s1442, 4
          %s1453 = int_to_ptr.vmem [resolvable:$true] %s1452
          %1455 = dma.vmem_to_hbm [thread:$0]  %s1453, 128, %s1450, %s1439
        $region88: #{tpu_custom_call.1} parent=59 // pred_fallthru
          _
      $region60: #{tpu_custom_call.1} parent=5 // pred_fallthru
        _
      %p1456 = scmp.le.s32.totalorder 2, %s32
      // Predicated region
      $region89: #{tpu_custom_call.1} parent=5 // pred_check
        %p1457 = pneg %p1456
      $region90: #{tpu_custom_call.1} parent=5 // pred_check_branch
        %1459 = sbr.rel (%p1457) target = $region92
      $region91: #{tpu_custom_call.1} parent=5 // pred_region
        %s1460 = ssub.s32 %s32, 2
        // Predicated region
        $region93: #{tpu_custom_call.1} parent=91 // pred_check
          %p1461 = pneg %p296
        $region94: #{tpu_custom_call.1} parent=91 // pred_check_branch
          %1463 = sbr.rel (%p1461) target = $region96
        $region95: #{tpu_custom_call.1} parent=91 // pred_region
          %s1464 = sand.u32 %s281, 1
          %s1465 = scalar_lea.sflag [#allocation8], %s1464
          %s1466 = sand.u32 %s281, 1
          %s1467 = smul.addr %s1466, 8
          %s1468 = scalar_lea.vmem [#allocation17], %s1467
          %1469 = dma.done %s1465, 128
        $region96: #{tpu_custom_call.1} parent=91 // pred_fallthru
          _
      $region92: #{tpu_custom_call.1} parent=5 // pred_fallthru
        _
    $region6: #{tpu_custom_call.1} parent=1 // loop_footer
      %s36 = sadd.s32 1, %s32
    $region7: #{tpu_custom_call.1} parent=1 // loop_footer_branch
      %31 = sbr.rel target = $region3
    $region8: #{tpu_custom_call.1} parent=1 // loop_exit
      _
    %1470 = vsyncpa [#allocation7], 1
    %s1471 = scalar_lea.sflag [#allocation7], 1
    %1472 = vsyncpa %s1471, 1
    %1473 = vsyncpa [#allocation10], 1
    %s1474 = scalar_lea.sflag [#allocation10], 1
    %1475 = vsyncpa %s1474, 1
    %1476 = vsyncpa [#allocation13], 1
    %1477 = vsyncpa [#allocation16], 1
    %1478 = vsyncpa [#allocation8], 1
    %s1479 = scalar_lea.sflag [#allocation8], 1
    %1480 = vsyncpa %s1479, 1

</llo_original>
